<compile_context>
chip_gen: v6e
topology: v6e:2x2x1
jax: 0.10.0
libtpu: 0.0.40
codegen_flags: <defaults>
</compile_context>

<pallas_src>
import functools

import jax
import jax.numpy as jnp
import numpy as np
from jax.experimental import pallas as pl
from jax.experimental.pallas import tpu as pltpu


# -----------------------------------------------------------------------------
# Fused kernel: conv1+LReLU -> [conv+BN+LReLU] x3 -> Reshape+Linear(+Sigmoid).
# -----------------------------------------------------------------------------
def _netd_fused_kernel(a_ref,                        # (2, (H/2+1)*B, Kpad1)
                       w1_ref, b1_ref,               # (4*Kpad1, N1), (1, N1)
                       sh2_ref, w2_ref, g2_ref, bt2_ref, avg2_ref,
                       sh3_ref, w3_ref, g3_ref, bt3_ref, avg3_ref,
                       sh4_ref, w4_ref, g4_ref, bt4_ref, avg4_ref,
                       wl_ref, bl_ref,               # (Hf*N4, ncls), (1, ncls)
                       out_ref,                      # (B, ncls)
                       *, B, Hos, neg_slope, eps, final_sigmoid):
    f32 = jnp.float32
    cd = a_ref.dtype                                  # matmul operand dtype

    def conv(a_even, a_odd, w_ref, Ho):
        # 4x4 / stride-2 / pad-1 conv as a SINGLE matmul: the four H taps are
        # lane-concatenated contiguous row slices of the even/odd H-phase
        # activations; the per-tap weight matrices were K-stacked on the host,
        # so the MXU accumulates all taps internally (one push/pop).
        cat = jnp.concatenate(
            [a_even[0:Ho * B], a_odd[0:Ho * B],
             a_even[B:(Ho + 1) * B], a_odd[B:(Ho + 1) * B]], axis=1)
        return jnp.dot(cat, w_ref[...], preferred_element_type=f32)

    def batchnorm(y, avg_ref, g_ref, bt_ref):
        # Training-mode BN with ONE stat matmul: E[x] and E[x^2] are two
        # independent sublane reductions, stacked to a (2, N) tile and block-
        # averaged over each channel's Wo lane group with a single dot.
        # var = E[x^2] - E[x]^2 (stats + subtraction stay in f32).  The conv
        # bias of BN layers is dropped by the caller (cancels under the mean).
        col_mean = jnp.mean(y, axis=0, keepdims=True)
        col_sq = jnp.mean(y * y, axis=0, keepdims=True)
        stats = jnp.concatenate([col_mean, col_sq], axis=0).astype(cd)
        ch = jnp.dot(stats, avg_ref[...], preferred_element_type=f32)
        ch_mean = ch[0:1]
        ch_var = ch[1:2] - ch_mean * ch_mean
        scale = g_ref[...] * jax.lax.rsqrt(ch_var + eps)
        return (y - ch_mean) * scale + bt_ref[...]

    def leaky(y):
        return jnp.where(y >= 0.0, y, neg_slope * y)

    # Layer 1: conv + bias + LeakyReLU (no BN).
    y = leaky(conv(a_ref[0], a_ref[1], w1_ref, Hos[0]) + b1_ref[...])

    # Layers 2..4: conv + BN + LeakyReLU.
    for sh_ref, w_ref, g_ref, bt_ref, avg_ref, Ho in (
            (sh2_ref, w2_ref, g2_ref, bt2_ref, avg2_ref, Hos[1]),
            (sh3_ref, w3_ref, g3_ref, bt3_ref, avg3_ref, Hos[2]),
            (sh4_ref, w4_ref, g4_ref, bt4_ref, avg4_ref, Hos[3])):
        yc = y.astype(cd)
        # Zero-pad H by 1 and split into even/odd H phases of the padded map
        # with ONE stacked constant selection matmul; the two phases are then
        # contiguous row slices of the result.
        # TODO(synk): at production batch sizes replace this O(B^2) selection
        # matmul with plain row-block copies into zero-initialised VMEM scratch
        # (and tile the batch with a real grid + two-pass BN for v7x's 2 TCs /
        # 64 MiB VMEM).
        sel = jnp.dot(sh_ref[...], yc, preferred_element_type=f32).astype(cd)
        hp_rows = sh_ref.shape[0] // 2
        y = leaky(batchnorm(conv(sel[:hp_rows], sel[hp_rows:], w_ref, Ho),
                            avg_ref, g_ref, bt_ref))

    # Head: Reshape(-1, ndf*8*2*2) + Linear (+ Sigmoid) as ONE matmul: the Hf
    # final H rows are lane-concatenated; linear weights were K-stacked on host.
    yc = y.astype(cd)
    Hf = Hos[3]
    cat = jnp.concatenate([yc[h * B:(h + 1) * B] for h in range(Hf)], axis=1)
    logits = jnp.dot(cat, wl_ref[...], preferred_element_type=f32) + bl_ref[...]
    if final_sigmoid:
        logits = jax.nn.sigmoid(logits)
    out_ref[...] = logits.astype(out_ref.dtype)


# -----------------------------------------------------------------------------
# Host-side (static) operand builders.
# -----------------------------------------------------------------------------
def _conv_weight_mat(w, w_in, k_pad):
    """Fold W taps + W zero-padding of a 4x4/s2/p1 conv into per-tap matrices
    (C_in*W_in, C_out*Wo) -- padded along K to k_pad -- and K-stack the four H
    taps into ONE (4*k_pad, C_out*Wo) matrix matching the kernel's
    lane-concatenated tap activations (tap order i = 0,1,2,3)."""
    co_n, ci_n, kh, kw = w.shape
    wo_n = w_in // 2
    k_in = ci_n * w_in
    m = np.zeros((kh, ci_n, w_in, co_n, wo_n), np.float32)
    for i in range(kh):
        for j in range(kw):
            wo = np.arange(wo_n)
            win = 2 * wo + j - 1                       # pad = 1 folded in
            ok = (win >= 0) & (win < w_in)
            m[i, :, win[ok], :, wo[ok]] = w[:, :, i, j].T
    m = m.reshape(kh, k_in, co_n * wo_n)
    if k_pad > k_in:
        m = np.concatenate(
            [m, np.zeros((kh, k_pad - k_in, co_n * wo_n), np.float32)], axis=1)
    return m.reshape(kh * k_pad, co_n * wo_n)


def _h_phase_mat(h_prev, batch):
    """Row-stacked constant matrix (2*(h/2+1)*B, h*B): zero-pad H by 1 and
    split the rows of an (h*B, N) activation into even/odd H phases of the
    padded map; a single dot yields both phases as contiguous row blocks."""
    hp = h_prev // 2 + 1
    sh = np.zeros((2, hp * batch, h_prev * batch), np.float32)
    for ph in range(2):
        for p in range(hp):
            h = 2 * p + ph - 1
            if 0 <= h < h_prev:
                for b in range(batch):
                    sh[ph, p * batch + b, h * batch + b] = 1.0
    return sh.reshape(2 * hp * batch, h_prev * batch)


def _block_avg_mat(co_n, wo_n):
    """(N, N) matrix turning per-column stats into per-channel stats broadcast
    back over each channel's Wo lane group (values are exact in bf16)."""
    return np.kron(np.eye(co_n, dtype=np.float32),
                   np.full((wo_n, wo_n), 1.0 / wo_n, dtype=np.float32))


def _head_mat(wl, co_n, h_n, w_n):
    """Linear weights regrouped per final H row and K-stacked: (h_n*C*Wo, ncls),
    matching the (C, H, W) flatten order of Reshape(-1, ndf*8*2*2) and the
    kernel's lane-concatenated final rows."""
    ncls = wl.shape[0]
    wlr = wl.reshape(ncls, co_n, h_n, w_n)
    out = np.zeros((h_n, co_n * w_n, ncls), np.float32)
    for ho in range(h_n):
        out[ho] = wlr[:, :, ho, :].transpose(1, 2, 0).reshape(co_n * w_n, ncls)
    return out.reshape(h_n * co_n * w_n, ncls)


# -----------------------------------------------------------------------------
# Wrapper: builds the jitted forward with all static operands folded once.
# -----------------------------------------------------------------------------
def make_netd_forward(params, *, batch, height, width, num_classes=1,
                      use_bf16=True, neg_slope=0.2, eps=1e-5):
    assert height == width, "square inputs only"
    assert height % 16 == 0, "four stride-2 convs need H, W divisible by 16"
    convs = params["convs"]
    wl, bl = params["linear"]
    cd = jnp.bfloat16 if use_bf16 else jnp.float32

    heights = [height // (2 ** k) for k in range(5)]   # per-layer input heights
    hos = tuple(heights[1:5])                          # conv output heights
    nc_in = convs[0][0].shape[1]

    # Layer 1 (no BN): K padded up to a lane-dense multiple of 128.
    w0, b0, _, _, bn0 = convs[0]
    assert not bn0
    k1 = nc_in * heights[0]
    k1_pad = -(-k1 // 128) * 128
    wmats = [jnp.asarray(_conv_weight_mat(np.asarray(w0), heights[0], k1_pad), cd)]
    bias1 = jnp.asarray(np.repeat(np.asarray(b0, np.float32), heights[1])[None, :])

    gammas, betas, avgs, shs = [], [], [], []
    for li in (1, 2, 3):
        w_l, _b_l, g_l, bt_l, bn_l = convs[li]
        assert bn_l
        wo_n = heights[li + 1]
        k_l = w_l.shape[1] * heights[li]
        wmats.append(jnp.asarray(_conv_weight_mat(np.asarray(w_l), heights[li], k_l), cd))
        gammas.append(jnp.asarray(np.repeat(np.asarray(g_l, np.float32), wo_n)[None, :]))
        betas.append(jnp.asarray(np.repeat(np.asarray(bt_l, np.float32), wo_n)[None, :]))
        avgs.append(jnp.asarray(_block_avg_mat(w_l.shape[0], wo_n), cd))
        shs.append(jnp.asarray(_h_phase_mat(heights[li], batch), cd))

    wl_m = jnp.asarray(_head_mat(np.asarray(wl, np.float32),
                                 convs[3][0].shape[0], heights[4], heights[4]), cd)
    bl_v = jnp.asarray(np.asarray(bl, np.float32)[None, :])

    static_ops = (
        wmats[0], bias1,
        shs[0], wmats[1], gammas[0], betas[0], avgs[0],
        shs[1], wmats[2], gammas[1], betas[1], avgs[1],
        shs[2], wmats[3], gammas[2], betas[2], avgs[2],
        wl_m, bl_v,
    )

    kernel = functools.partial(
        _netd_fused_kernel, B=batch, Hos=hos, neg_slope=neg_slope, eps=eps,
        final_sigmoid=(num_classes == 1))

    # Advisory cost estimate so XLA schedules the surrounding (tiny) ops well.
    n_cols = [int(wm.shape[1]) for wm in wmats]
    flops = 0
    for li in range(4):                                           # fused convs
        flops += 2 * hos[li] * batch * int(wmats[li].shape[0]) * n_cols[li]
    for li, s in enumerate(shs):                                  # phase dots
        flops += 2 * int(s.shape[0]) * int(s.shape[1]) * n_cols[li + 1]
    for a in avgs:                                                # BN stat dots
        flops += 2 * 2 * int(a.shape[0]) * int(a.shape[1])
    flops += 2 * batch * int(wl_m.shape[0]) * num_classes         # head
    transcendentals = 3 * max(n_cols) + batch * num_classes       # rsqrt + sigmoid
    itemsize = 2 if use_bf16 else 4
    a_in_bytes = 2 * (heights[0] // 2 + 1) * batch * k1_pad * itemsize
    bytes_accessed = a_in_bytes + batch * num_classes * 4
    bytes_accessed += sum(int(o.size) * int(o.dtype.itemsize) for o in static_ops)

    n_inputs = 1 + len(static_ops)
    fused_call = pl.pallas_call(
        kernel,
        out_shape=jax.ShapeDtypeStruct((batch, num_classes), jnp.float32),
        # Whole-array blocks: every operand and all intermediates fit VMEM, so
        # the whole network runs as a single grid-less program.
        in_specs=[pl.BlockSpec(memory_space=pltpu.MemorySpace.VMEM)] * n_inputs,
        out_specs=pl.BlockSpec(memory_space=pltpu.MemorySpace.VMEM),
        cost_estimate=pl.CostEstimate(flops=int(flops),
                                      transcendentals=int(transcendentals),
                                      bytes_accessed=int(bytes_accessed)),
    )
    # TODO(synk): for large batches, tile the batch dimension with a real grid
    # (dimension_semantics=("parallel",) to use both v7x TensorCores), switch BN
    # to two-pass sum/sumsq accumulation across batch tiles, and size
    # pltpu.CompilerParams(vmem_limit_bytes=...) to the chosen tile.

    def _input_phases(x):
        # (B, C, H, W) -> (2, (H/2+1)*B, Kpad1): zero-pad H by 1, split padded
        # rows into even/odd phases, lay out as rows=(phase_row, batch),
        # cols=(channel, width) zero-padded to a multiple of 128 lanes.
        xb, xc, xh, xw = x.shape
        xp = jnp.pad(x, ((0, 0), (0, 0), (1, 1), (0, 0)))
        phases = []
        for ph in range(2):
            v = jnp.transpose(xp[:, :, ph::2, :], (2, 0, 1, 3))
            v = v.reshape((xh // 2 + 1) * xb, xc * xw)
            if k1_pad > k1:
                v = jnp.pad(v, ((0, 0), (0, k1_pad - k1)))
            phases.append(v)
        return jnp.stack(phases, axis=0).astype(cd)

    @jax.jit
    def forward(x):
        assert x.shape == (batch, nc_in, height, width)
        out = fused_call(_input_phases(x), *static_ops)
        return out[:, 0] if num_classes == 1 else out

    return forward


# -----------------------------------------------------------------------------
# Parameters + pure-JAX reference (for correctness checking).
# -----------------------------------------------------------------------------
def init_params(key, nc=3, ndf=8, num_classes=1):
    chans = [(nc, ndf, False),
             (ndf, ndf * 2, True),
             (ndf * 2, ndf * 4, True),
             (ndf * 4, ndf * 8, True)]
    keys = iter(jax.random.split(key, 4 * 4 + 2))
    convs = []
    for ci, co, use_bn in chans:
        w = jax.random.normal(next(keys), (co, ci, 4, 4), jnp.float32) * 0.05
        b = jax.random.normal(next(keys), (co,), jnp.float32) * 0.05
        if use_bn:
            g = 1.0 + 0.1 * jax.random.normal(next(keys), (co,), jnp.float32)
            bt = 0.1 * jax.random.normal(next(keys), (co,), jnp.float32)
        else:
            g = jnp.ones((co,), jnp.float32)
            bt = jnp.zeros((co,), jnp.float32)
            _ = next(keys)
            _ = next(keys)
        convs.append((w, b, g, bt, use_bn))
    wl = jax.random.normal(next(keys), (num_classes, ndf * 8 * 2 * 2),
                           jnp.float32) * 0.05
    bl = jax.random.normal(next(keys), (num_classes,), jnp.float32) * 0.05
    return {"convs": convs, "linear": (wl, bl)}


def reference_forward(x, params, *, num_classes=1, eps=1e-5):
    """Pure-JAX reference of the same forward pass (training-mode BN)."""
    h = x
    for (w, b, g, bt, use_bn) in params["convs"]:
        y = jax.lax.conv_general_dilated(
            h, w, window_strides=(2, 2), padding=((1, 1), (1, 1)),
            dimension_numbers=("NCHW", "OIHW", "NCHW"))
        y = y + b[None, :, None, None]
        if use_bn:
            mean = jnp.mean(y, axis=(0, 2, 3), keepdims=True)
            var = jnp.mean(jnp.square(y - mean), axis=(0, 2, 3), keepdims=True)
            y = (y - mean) / jnp.sqrt(var + eps) * g[None, :, None, None] \
                + bt[None, :, None, None]
        h = jnp.where(y >= 0, y, 0.2 * y)
    flat = h.reshape(h.shape[0], -1)
    wl, bl = params["linear"]
    out = flat @ wl.T + bl
    if num_classes == 1:
        out = jax.nn.sigmoid(out).squeeze(1)
    return out


if __name__ == "__main__":
    key = jax.random.PRNGKey(0)
    kx, kp = jax.random.split(key)

    # 32x32 input: after four stride-2 convs the spatial size is 2x2, as the
    # module's Reshape(-1, ndf*8*2*2) requires.  ndf=8 keeps shapes small and
    # makes every fused layer's lane dimension exactly 128.
    B, NC, NDF, H = 2, 3, 8, 32
    x = jax.random.normal(kx, (B, NC, H, H), jnp.float32)
    params = init_params(kp, nc=NC, ndf=NDF, num_classes=1)

    ref = np.asarray(reference_forward(x, params, num_classes=1))

    # f32 matmul operands: validates the restructured algorithm (tap-stacked
    # conv weights, stacked phase-selection dot, merged BN-stat dot).
    out_f32 = np.asarray(jax.block_until_ready(
        make_netd_forward(params, batch=B, height=H, width=H, num_classes=1,
                          use_bf16=False)(x)))
    np.testing.assert_allclose(out_f32, ref, rtol=1e-2, atol=1e-2)

    # bf16 matmul operands (fast path): f32 accumulation, f32 BN/activations.
    out_bf16 = np.asarray(jax.block_until_ready(
        make_netd_forward(params, batch=B, height=H, width=H, num_classes=1,
                          use_bf16=True)(x)))
    np.testing.assert_allclose(out_bf16, ref, rtol=2e-2, atol=2e-2)

    print("KERNEL_OK")
</pallas_src>

<mosaic_0001>
module attributes {stable_mosaic.version = 11 : i64} {
  func.func @_netd_fused_kernel(%arg0: memref<2x34x128xf32, #tpu.memory_space<vmem>>, %arg1: memref<512x128xf32, #tpu.memory_space<vmem>>, %arg2: memref<1x128xf32, #tpu.memory_space<vmem>>, %arg3: memref<36x32xf32, #tpu.memory_space<vmem>>, %arg4: memref<512x128xf32, #tpu.memory_space<vmem>>, %arg5: memref<1x128xf32, #tpu.memory_space<vmem>>, %arg6: memref<1x128xf32, #tpu.memory_space<vmem>>, %arg7: memref<128x128xf32, #tpu.memory_space<vmem>>, %arg8: memref<20x16xf32, #tpu.memory_space<vmem>>, %arg9: memref<512x128xf32, #tpu.memory_space<vmem>>, %arg10: memref<1x128xf32, #tpu.memory_space<vmem>>, %arg11: memref<1x128xf32, #tpu.memory_space<vmem>>, %arg12: memref<128x128xf32, #tpu.memory_space<vmem>>, %arg13: memref<12x8xf32, #tpu.memory_space<vmem>>, %arg14: memref<512x128xf32, #tpu.memory_space<vmem>>, %arg15: memref<1x128xf32, #tpu.memory_space<vmem>>, %arg16: memref<1x128xf32, #tpu.memory_space<vmem>>, %arg17: memref<128x128xf32, #tpu.memory_space<vmem>>, %arg18: memref<256x1xf32, #tpu.memory_space<vmem>>, %arg19: memref<1x1xf32, #tpu.memory_space<vmem>>, %arg20: memref<2x1xf32, #tpu.memory_space<vmem>>) attributes {dimension_semantics = [], scalar_prefetch = 0 : i64, scratch_operands = 0 : i64, tpu.core_type = #tpu.core_type<tc>} {
    %c0 = arith.constant 0 : index
    %c0_0 = arith.constant 0 : index
    %c0_1 = arith.constant 0 : index
    %0 = vector.load %arg0[%c0, %c0_0, %c0_1] : memref<2x34x128xf32, #tpu.memory_space<vmem>>, vector<1x34x128xf32>
    %1 = vector.shape_cast %0 : vector<1x34x128xf32> to vector<34x128xf32>
    %c1 = arith.constant 1 : index
    %c0_2 = arith.constant 0 : index
    %c0_3 = arith.constant 0 : index
    %2 = vector.load %arg0[%c1, %c0_2, %c0_3] : memref<2x34x128xf32, #tpu.memory_space<vmem>>, vector<1x34x128xf32>
    %3 = vector.shape_cast %2 : vector<1x34x128xf32> to vector<34x128xf32>
    %4 = vector.extract_strided_slice %1 {offsets = [0, 0], sizes = [32, 128], strides = [1, 1]} : vector<34x128xf32> to vector<32x128xf32>
    %5 = vector.extract_strided_slice %3 {offsets = [0, 0], sizes = [32, 128], strides = [1, 1]} : vector<34x128xf32> to vector<32x128xf32>
    %6 = vector.extract_strided_slice %1 {offsets = [2, 0], sizes = [32, 128], strides = [1, 1]} : vector<34x128xf32> to vector<32x128xf32>
    %7 = vector.extract_strided_slice %3 {offsets = [2, 0], sizes = [32, 128], strides = [1, 1]} : vector<34x128xf32> to vector<32x128xf32>
    %8 = tpu.concatenate %4, %5, %6, %7 in 1 : vector<32x128xf32>, vector<32x128xf32>, vector<32x128xf32>, vector<32x128xf32> -> vector<32x512xf32>
    %c0_4 = arith.constant 0 : index
    %c0_5 = arith.constant 0 : index
    %9 = vector.load %arg1[%c0_4, %c0_5] : memref<512x128xf32, #tpu.memory_space<vmem>>, vector<512x128xf32>
    %cst = arith.constant dense<0.000000e+00> : vector<32x128xf32>
    %10 = tpu.matmul %8, %9, %cst {dimension_numbers = #tpu.dot_dimension_numbers<[1], [0], [0], [1], [0, 0, 1, 1], [], []>} : vector<32x512xf32>, vector<512x128xf32>, vector<32x128xf32> -> vector<32x128xf32>
    %c0_6 = arith.constant 0 : index
    %c0_7 = arith.constant 0 : index
    %11 = vector.load %arg2[%c0_6, %c0_7] : memref<1x128xf32, #tpu.memory_space<vmem>>, vector<1x128xf32>
    %12 = vector.broadcast %11 : vector<1x128xf32> to vector<32x128xf32>
    %13 = arith.addf %10, %12 : vector<32x128xf32>
    %cst_8 = arith.constant 0.000000e+00 : f32
    %14 = vector.broadcast %cst_8 : f32 to vector<32x128xf32>
    %15 = arith.cmpf oge, %13, %14 : vector<32x128xf32>
    %cst_9 = arith.constant 2.000000e-01 : f32
    %16 = vector.broadcast %cst_9 : f32 to vector<32x128xf32>
    %17 = arith.mulf %16, %13 : vector<32x128xf32>
    %18 = arith.select %15, %13, %17 : vector<32x128xi1>, vector<32x128xf32>
    %c0_10 = arith.constant 0 : index
    %c0_11 = arith.constant 0 : index
    %19 = vector.load %arg3[%c0_10, %c0_11] : memref<36x32xf32, #tpu.memory_space<vmem>>, vector<36x32xf32>
    %cst_12 = arith.constant dense<0.000000e+00> : vector<36x128xf32>
    %20 = tpu.matmul %19, %18, %cst_12 {dimension_numbers = #tpu.dot_dimension_numbers<[1], [0], [0], [1], [0, 0, 1, 1], [], []>} : vector<36x32xf32>, vector<32x128xf32>, vector<36x128xf32> -> vector<36x128xf32>
    %21 = vector.extract_strided_slice %20 {offsets = [0, 0], sizes = [18, 128], strides = [1, 1]} : vector<36x128xf32> to vector<18x128xf32>
    %22 = vector.extract_strided_slice %20 {offsets = [18, 0], sizes = [18, 128], strides = [1, 1]} : vector<36x128xf32> to vector<18x128xf32>
    %23 = vector.extract_strided_slice %21 {offsets = [0, 0], sizes = [16, 128], strides = [1, 1]} : vector<18x128xf32> to vector<16x128xf32>
    %24 = vector.extract_strided_slice %22 {offsets = [0, 0], sizes = [16, 128], strides = [1, 1]} : vector<18x128xf32> to vector<16x128xf32>
    %25 = vector.extract_strided_slice %21 {offsets = [2, 0], sizes = [16, 128], strides = [1, 1]} : vector<18x128xf32> to vector<16x128xf32>
    %26 = vector.extract_strided_slice %22 {offsets = [2, 0], sizes = [16, 128], strides = [1, 1]} : vector<18x128xf32> to vector<16x128xf32>
    %27 = tpu.concatenate %23, %24, %25, %26 in 1 : vector<16x128xf32>, vector<16x128xf32>, vector<16x128xf32>, vector<16x128xf32> -> vector<16x512xf32>
    %c0_13 = arith.constant 0 : index
    %c0_14 = arith.constant 0 : index
    %28 = vector.load %arg4[%c0_13, %c0_14] : memref<512x128xf32, #tpu.memory_space<vmem>>, vector<512x128xf32>
    %cst_15 = arith.constant dense<0.000000e+00> : vector<16x128xf32>
    %29 = tpu.matmul %27, %28, %cst_15 {dimension_numbers = #tpu.dot_dimension_numbers<[1], [0], [0], [1], [0, 0, 1, 1], [], []>} : vector<16x512xf32>, vector<512x128xf32>, vector<16x128xf32> -> vector<16x128xf32>
    %cst_16 = arith.constant dense<0.000000e+00> : vector<128xf32>
    %30 = vector.multi_reduction <add>, %29, %cst_16 [0] : vector<16x128xf32> to vector<128xf32>
    %31 = vector.shape_cast %30 : vector<128xf32> to vector<1x128xf32>
    %cst_17 = arith.constant 1.600000e+01 : f32
    %32 = vector.broadcast %cst_17 : f32 to vector<1x128xf32>
    %33 = arith.divf %31, %32 : vector<1x128xf32>
    %34 = arith.mulf %29, %29 : vector<16x128xf32>
    %cst_18 = arith.constant dense<0.000000e+00> : vector<128xf32>
    %35 = vector.multi_reduction <add>, %34, %cst_18 [0] : vector<16x128xf32> to vector<128xf32>
    %36 = vector.shape_cast %35 : vector<128xf32> to vector<1x128xf32>
    %cst_19 = arith.constant 1.600000e+01 : f32
    %37 = vector.broadcast %cst_19 : f32 to vector<1x128xf32>
    %38 = arith.divf %36, %37 : vector<1x128xf32>
    %39 = tpu.concatenate %33, %38 in 0 : vector<1x128xf32>, vector<1x128xf32> -> vector<2x128xf32>
    %c0_20 = arith.constant 0 : index
    %c0_21 = arith.constant 0 : index
    %40 = vector.load %arg7[%c0_20, %c0_21] : memref<128x128xf32, #tpu.memory_space<vmem>>, vector<128x128xf32>
    %cst_22 = arith.constant dense<0.000000e+00> : vector<2x128xf32>
    %41 = tpu.matmul %39, %40, %cst_22 {dimension_numbers = #tpu.dot_dimension_numbers<[1], [0], [0], [1], [0, 0, 1, 1], [], []>} : vector<2x128xf32>, vector<128x128xf32>, vector<2x128xf32> -> vector<2x128xf32>
    %42 = vector.extract_strided_slice %41 {offsets = [0, 0], sizes = [1, 128], strides = [1, 1]} : vector<2x128xf32> to vector<1x128xf32>
    %43 = vector.extract_strided_slice %41 {offsets = [1, 0], sizes = [1, 128], strides = [1, 1]} : vector<2x128xf32> to vector<1x128xf32>
    %44 = arith.mulf %42, %42 : vector<1x128xf32>
    %45 = arith.subf %43, %44 : vector<1x128xf32>
    %c0_23 = arith.constant 0 : index
    %c0_24 = arith.constant 0 : index
    %46 = vector.load %arg5[%c0_23, %c0_24] : memref<1x128xf32, #tpu.memory_space<vmem>>, vector<1x128xf32>
    %cst_25 = arith.constant 9.99999974E-6 : f32
    %47 = vector.broadcast %cst_25 : f32 to vector<1x128xf32>
    %48 = arith.addf %45, %47 : vector<1x128xf32>
    %49 = math.rsqrt %48 : vector<1x128xf32>
    %50 = arith.mulf %46, %49 : vector<1x128xf32>
    %51 = vector.broadcast %42 : vector<1x128xf32> to vector<16x128xf32>
    %52 = arith.subf %29, %51 : vector<16x128xf32>
    %53 = vector.broadcast %50 : vector<1x128xf32> to vector<16x128xf32>
    %54 = arith.mulf %52, %53 : vector<16x128xf32>
    %c0_26 = arith.constant 0 : index
    %c0_27 = arith.constant 0 : index
    %55 = vector.load %arg6[%c0_26, %c0_27] : memref<1x128xf32, #tpu.memory_space<vmem>>, vector<1x128xf32>
    %56 = vector.broadcast %55 : vector<1x128xf32> to vector<16x128xf32>
    %57 = arith.addf %54, %56 : vector<16x128xf32>
    %cst_28 = arith.constant 0.000000e+00 : f32
    %58 = vector.broadcast %cst_28 : f32 to vector<16x128xf32>
    %59 = arith.cmpf oge, %57, %58 : vector<16x128xf32>
    %cst_29 = arith.constant 2.000000e-01 : f32
    %60 = vector.broadcast %cst_29 : f32 to vector<16x128xf32>
    %61 = arith.mulf %60, %57 : vector<16x128xf32>
    %62 = arith.select %59, %57, %61 : vector<16x128xi1>, vector<16x128xf32>
    %c0_30 = arith.constant 0 : index
    %c0_31 = arith.constant 0 : index
    %63 = vector.load %arg8[%c0_30, %c0_31] : memref<20x16xf32, #tpu.memory_space<vmem>>, vector<20x16xf32>
    %cst_32 = arith.constant dense<0.000000e+00> : vector<20x128xf32>
    %64 = tpu.matmul %63, %62, %cst_32 {dimension_numbers = #tpu.dot_dimension_numbers<[1], [0], [0], [1], [0, 0, 1, 1], [], []>} : vector<20x16xf32>, vector<16x128xf32>, vector<20x128xf32> -> vector<20x128xf32>
    %65 = vector.extract_strided_slice %64 {offsets = [0, 0], sizes = [10, 128], strides = [1, 1]} : vector<20x128xf32> to vector<10x128xf32>
    %66 = vector.extract_strided_slice %64 {offsets = [10, 0], sizes = [10, 128], strides = [1, 1]} : vector<20x128xf32> to vector<10x128xf32>
    %67 = vector.extract_strided_slice %65 {offsets = [0, 0], sizes = [8, 128], strides = [1, 1]} : vector<10x128xf32> to vector<8x128xf32>
    %68 = vector.extract_strided_slice %66 {offsets = [0, 0], sizes = [8, 128], strides = [1, 1]} : vector<10x128xf32> to vector<8x128xf32>
    %69 = vector.extract_strided_slice %65 {offsets = [2, 0], sizes = [8, 128], strides = [1, 1]} : vector<10x128xf32> to vector<8x128xf32>
    %70 = vector.extract_strided_slice %66 {offsets = [2, 0], sizes = [8, 128], strides = [1, 1]} : vector<10x128xf32> to vector<8x128xf32>
    %71 = tpu.concatenate %67, %68, %69, %70 in 1 : vector<8x128xf32>, vector<8x128xf32>, vector<8x128xf32>, vector<8x128xf32> -> vector<8x512xf32>
    %c0_33 = arith.constant 0 : index
    %c0_34 = arith.constant 0 : index
    %72 = vector.load %arg9[%c0_33, %c0_34] : memref<512x128xf32, #tpu.memory_space<vmem>>, vector<512x128xf32>
    %cst_35 = arith.constant dense<0.000000e+00> : vector<8x128xf32>
    %73 = tpu.matmul %71, %72, %cst_35 {dimension_numbers = #tpu.dot_dimension_numbers<[1], [0], [0], [1], [0, 0, 1, 1], [], []>} : vector<8x512xf32>, vector<512x128xf32>, vector<8x128xf32> -> vector<8x128xf32>
    %cst_36 = arith.constant dense<0.000000e+00> : vector<128xf32>
    %74 = vector.multi_reduction <add>, %73, %cst_36 [0] : vector<8x128xf32> to vector<128xf32>
    %75 = vector.shape_cast %74 : vector<128xf32> to vector<1x128xf32>
    %cst_37 = arith.constant 8.000000e+00 : f32
    %76 = vector.broadcast %cst_37 : f32 to vector<1x128xf32>
    %77 = arith.divf %75, %76 : vector<1x128xf32>
    %78 = arith.mulf %73, %73 : vector<8x128xf32>
    %cst_38 = arith.constant dense<0.000000e+00> : vector<128xf32>
    %79 = vector.multi_reduction <add>, %78, %cst_38 [0] : vector<8x128xf32> to vector<128xf32>
    %80 = vector.shape_cast %79 : vector<128xf32> to vector<1x128xf32>
    %cst_39 = arith.constant 8.000000e+00 : f32
    %81 = vector.broadcast %cst_39 : f32 to vector<1x128xf32>
    %82 = arith.divf %80, %81 : vector<1x128xf32>
    %83 = tpu.concatenate %77, %82 in 0 : vector<1x128xf32>, vector<1x128xf32> -> vector<2x128xf32>
    %c0_40 = arith.constant 0 : index
    %c0_41 = arith.constant 0 : index
    %84 = vector.load %arg12[%c0_40, %c0_41] : memref<128x128xf32, #tpu.memory_space<vmem>>, vector<128x128xf32>
    %cst_42 = arith.constant dense<0.000000e+00> : vector<2x128xf32>
    %85 = tpu.matmul %83, %84, %cst_42 {dimension_numbers = #tpu.dot_dimension_numbers<[1], [0], [0], [1], [0, 0, 1, 1], [], []>} : vector<2x128xf32>, vector<128x128xf32>, vector<2x128xf32> -> vector<2x128xf32>
    %86 = vector.extract_strided_slice %85 {offsets = [0, 0], sizes = [1, 128], strides = [1, 1]} : vector<2x128xf32> to vector<1x128xf32>
    %87 = vector.extract_strided_slice %85 {offsets = [1, 0], sizes = [1, 128], strides = [1, 1]} : vector<2x128xf32> to vector<1x128xf32>
    %88 = arith.mulf %86, %86 : vector<1x128xf32>
    %89 = arith.subf %87, %88 : vector<1x128xf32>
    %c0_43 = arith.constant 0 : index
    %c0_44 = arith.constant 0 : index
    %90 = vector.load %arg10[%c0_43, %c0_44] : memref<1x128xf32, #tpu.memory_space<vmem>>, vector<1x128xf32>
    %cst_45 = arith.constant 9.99999974E-6 : f32
    %91 = vector.broadcast %cst_45 : f32 to vector<1x128xf32>
    %92 = arith.addf %89, %91 : vector<1x128xf32>
    %93 = math.rsqrt %92 : vector<1x128xf32>
    %94 = arith.mulf %90, %93 : vector<1x128xf32>
    %95 = vector.broadcast %86 : vector<1x128xf32> to vector<8x128xf32>
    %96 = arith.subf %73, %95 : vector<8x128xf32>
    %97 = vector.broadcast %94 : vector<1x128xf32> to vector<8x128xf32>
    %98 = arith.mulf %96, %97 : vector<8x128xf32>
    %c0_46 = arith.constant 0 : index
    %c0_47 = arith.constant 0 : index
    %99 = vector.load %arg11[%c0_46, %c0_47] : memref<1x128xf32, #tpu.memory_space<vmem>>, vector<1x128xf32>
    %100 = vector.broadcast %99 : vector<1x128xf32> to vector<8x128xf32>
    %101 = arith.addf %98, %100 : vector<8x128xf32>
    %cst_48 = arith.constant 0.000000e+00 : f32
    %102 = vector.broadcast %cst_48 : f32 to vector<8x128xf32>
    %103 = arith.cmpf oge, %101, %102 : vector<8x128xf32>
    %cst_49 = arith.constant 2.000000e-01 : f32
    %104 = vector.broadcast %cst_49 : f32 to vector<8x128xf32>
    %105 = arith.mulf %104, %101 : vector<8x128xf32>
    %106 = arith.select %103, %101, %105 : vector<8x128xi1>, vector<8x128xf32>
    %c0_50 = arith.constant 0 : index
    %c0_51 = arith.constant 0 : index
    %107 = vector.load %arg13[%c0_50, %c0_51] : memref<12x8xf32, #tpu.memory_space<vmem>>, vector<12x8xf32>
    %cst_52 = arith.constant dense<0.000000e+00> : vector<12x128xf32>
    %108 = tpu.matmul %107, %106, %cst_52 {dimension_numbers = #tpu.dot_dimension_numbers<[1], [0], [0], [1], [0, 0, 1, 1], [], []>} : vector<12x8xf32>, vector<8x128xf32>, vector<12x128xf32> -> vector<12x128xf32>
    %109 = vector.extract_strided_slice %108 {offsets = [0, 0], sizes = [6, 128], strides = [1, 1]} : vector<12x128xf32> to vector<6x128xf32>
    %110 = vector.extract_strided_slice %108 {offsets = [6, 0], sizes = [6, 128], strides = [1, 1]} : vector<12x128xf32> to vector<6x128xf32>
    %111 = vector.extract_strided_slice %109 {offsets = [0, 0], sizes = [4, 128], strides = [1, 1]} : vector<6x128xf32> to vector<4x128xf32>
    %112 = vector.extract_strided_slice %110 {offsets = [0, 0], sizes = [4, 128], strides = [1, 1]} : vector<6x128xf32> to vector<4x128xf32>
    %113 = vector.extract_strided_slice %109 {offsets = [2, 0], sizes = [4, 128], strides = [1, 1]} : vector<6x128xf32> to vector<4x128xf32>
    %114 = vector.extract_strided_slice %110 {offsets = [2, 0], sizes = [4, 128], strides = [1, 1]} : vector<6x128xf32> to vector<4x128xf32>
    %115 = tpu.concatenate %111, %112, %113, %114 in 1 : vector<4x128xf32>, vector<4x128xf32>, vector<4x128xf32>, vector<4x128xf32> -> vector<4x512xf32>
    %c0_53 = arith.constant 0 : index
    %c0_54 = arith.constant 0 : index
    %116 = vector.load %arg14[%c0_53, %c0_54] : memref<512x128xf32, #tpu.memory_space<vmem>>, vector<512x128xf32>
    %cst_55 = arith.constant dense<0.000000e+00> : vector<4x128xf32>
    %117 = tpu.matmul %115, %116, %cst_55 {dimension_numbers = #tpu.dot_dimension_numbers<[1], [0], [0], [1], [0, 0, 1, 1], [], []>} : vector<4x512xf32>, vector<512x128xf32>, vector<4x128xf32> -> vector<4x128xf32>
    %cst_56 = arith.constant dense<0.000000e+00> : vector<128xf32>
    %118 = vector.multi_reduction <add>, %117, %cst_56 [0] : vector<4x128xf32> to vector<128xf32>
    %119 = vector.shape_cast %118 : vector<128xf32> to vector<1x128xf32>
    %cst_57 = arith.constant 4.000000e+00 : f32
    %120 = vector.broadcast %cst_57 : f32 to vector<1x128xf32>
    %121 = arith.divf %119, %120 : vector<1x128xf32>
    %122 = arith.mulf %117, %117 : vector<4x128xf32>
    %cst_58 = arith.constant dense<0.000000e+00> : vector<128xf32>
    %123 = vector.multi_reduction <add>, %122, %cst_58 [0] : vector<4x128xf32> to vector<128xf32>
    %124 = vector.shape_cast %123 : vector<128xf32> to vector<1x128xf32>
    %cst_59 = arith.constant 4.000000e+00 : f32
    %125 = vector.broadcast %cst_59 : f32 to vector<1x128xf32>
    %126 = arith.divf %124, %125 : vector<1x128xf32>
    %127 = tpu.concatenate %121, %126 in 0 : vector<1x128xf32>, vector<1x128xf32> -> vector<2x128xf32>
    %c0_60 = arith.constant 0 : index
    %c0_61 = arith.constant 0 : index
    %128 = vector.load %arg17[%c0_60, %c0_61] : memref<128x128xf32, #tpu.memory_space<vmem>>, vector<128x128xf32>
    %cst_62 = arith.constant dense<0.000000e+00> : vector<2x128xf32>
    %129 = tpu.matmul %127, %128, %cst_62 {dimension_numbers = #tpu.dot_dimension_numbers<[1], [0], [0], [1], [0, 0, 1, 1], [], []>} : vector<2x128xf32>, vector<128x128xf32>, vector<2x128xf32> -> vector<2x128xf32>
    %130 = vector.extract_strided_slice %129 {offsets = [0, 0], sizes = [1, 128], strides = [1, 1]} : vector<2x128xf32> to vector<1x128xf32>
    %131 = vector.extract_strided_slice %129 {offsets = [1, 0], sizes = [1, 128], strides = [1, 1]} : vector<2x128xf32> to vector<1x128xf32>
    %132 = arith.mulf %130, %130 : vector<1x128xf32>
    %133 = arith.subf %131, %132 : vector<1x128xf32>
    %c0_63 = arith.constant 0 : index
    %c0_64 = arith.constant 0 : index
    %134 = vector.load %arg15[%c0_63, %c0_64] : memref<1x128xf32, #tpu.memory_space<vmem>>, vector<1x128xf32>
    %cst_65 = arith.constant 9.99999974E-6 : f32
    %135 = vector.broadcast %cst_65 : f32 to vector<1x128xf32>
    %136 = arith.addf %133, %135 : vector<1x128xf32>
    %137 = math.rsqrt %136 : vector<1x128xf32>
    %138 = arith.mulf %134, %137 : vector<1x128xf32>
    %139 = vector.broadcast %130 : vector<1x128xf32> to vector<4x128xf32>
    %140 = arith.subf %117, %139 : vector<4x128xf32>
    %141 = vector.broadcast %138 : vector<1x128xf32> to vector<4x128xf32>
    %142 = arith.mulf %140, %141 : vector<4x128xf32>
    %c0_66 = arith.constant 0 : index
    %c0_67 = arith.constant 0 : index
    %143 = vector.load %arg16[%c0_66, %c0_67] : memref<1x128xf32, #tpu.memory_space<vmem>>, vector<1x128xf32>
    %144 = vector.broadcast %143 : vector<1x128xf32> to vector<4x128xf32>
    %145 = arith.addf %142, %144 : vector<4x128xf32>
    %cst_68 = arith.constant 0.000000e+00 : f32
    %146 = vector.broadcast %cst_68 : f32 to vector<4x128xf32>
    %147 = arith.cmpf oge, %145, %146 : vector<4x128xf32>
    %cst_69 = arith.constant 2.000000e-01 : f32
    %148 = vector.broadcast %cst_69 : f32 to vector<4x128xf32>
    %149 = arith.mulf %148, %145 : vector<4x128xf32>
    %150 = arith.select %147, %145, %149 : vector<4x128xi1>, vector<4x128xf32>
    %151 = vector.extract_strided_slice %150 {offsets = [0, 0], sizes = [2, 128], strides = [1, 1]} : vector<4x128xf32> to vector<2x128xf32>
    %152 = vector.extract_strided_slice %150 {offsets = [2, 0], sizes = [2, 128], strides = [1, 1]} : vector<4x128xf32> to vector<2x128xf32>
    %153 = tpu.concatenate %151, %152 in 1 : vector<2x128xf32>, vector<2x128xf32> -> vector<2x256xf32>
    %c0_70 = arith.constant 0 : index
    %c0_71 = arith.constant 0 : index
    %154 = vector.load %arg18[%c0_70, %c0_71] : memref<256x1xf32, #tpu.memory_space<vmem>>, vector<256x1xf32>
    %cst_72 = arith.constant dense<0.000000e+00> : vector<2x1xf32>
    %155 = tpu.matmul %153, %154, %cst_72 {dimension_numbers = #tpu.dot_dimension_numbers<[1], [0], [0], [1], [0, 0, 1, 1], [], []>} : vector<2x256xf32>, vector<256x1xf32>, vector<2x1xf32> -> vector<2x1xf32>
    %c0_73 = arith.constant 0 : index
    %c0_74 = arith.constant 0 : index
    %156 = vector.load %arg19[%c0_73, %c0_74] : memref<1x1xf32, #tpu.memory_space<vmem>>, vector<1x1xf32>
    %157 = vector.broadcast %156 : vector<1x1xf32> to vector<2x1xf32>
    %158 = arith.addf %155, %157 : vector<2x1xf32>
    %159 = arith.negf %158 : vector<2x1xf32>
    %160 = math.exp %159 : vector<2x1xf32>
    %cst_75 = arith.constant 1.000000e+00 : f32
    %161 = vector.broadcast %cst_75 : f32 to vector<2x1xf32>
    %162 = arith.addf %161, %160 : vector<2x1xf32>
    %163 = arith.divf %161, %162 : vector<2x1xf32>
    %c0_76 = arith.constant 0 : index
    %c0_77 = arith.constant 0 : index
    %164 = vector.load %arg20[%c0_76, %c0_77] : memref<2x1xf32, #tpu.memory_space<vmem>>, vector<2x1xf32>
    tpu.vector_store %arg20[%c0_76, %c0_77], %163 {strides = array<i32>} : memref<2x1xf32, #tpu.memory_space<vmem>>, vector<2x1xf32>,
    return
  }
}

</mosaic_0001>

<llo_original>
// kernel: forward.1
$region0: #{forward.1}
  #allocation0 [shape = 'u32[]', space=smem, size = 0x4, offset = 0x4, fixed_abs, tag = 'smem constant byte address 0x4 - core index']
  #allocation1 [shape = 'u32[144,128]{1,0:T(1,128)}', space=vmem, size = 0x12000, scoped, tag = 'internal scratch']
  #allocation2 [shape = 'f32[1,1]{1,0:T(1,128)S(1)}', space=vmem, size = 0x200, scoped, tag = 'scoped memory for forward.1']
  %s0 = inlined_call_operand.vmem [shape: f32[2,34,128], index: 0, kind: input, shape index: {}]
  %s1 = inlined_call_operand.vmem [shape: f32[512,128], index: 1, kind: input, shape index: {}]
  %s2 = inlined_call_operand.vmem [shape: f32[1,128], index: 2, kind: input, shape index: {}]
  %s3 = inlined_call_operand.vmem [shape: f32[36,32], index: 3, kind: input, shape index: {}]
  %s4 = inlined_call_operand.vmem [shape: f32[512,128], index: 4, kind: input, shape index: {}]
  %s5 = inlined_call_operand.vmem [shape: f32[1,128], index: 5, kind: input, shape index: {}]
  %s6 = inlined_call_operand.vmem [shape: f32[1,128], index: 6, kind: input, shape index: {}]
  %s7 = inlined_call_operand.vmem [shape: f32[128,128], index: 7, kind: input, shape index: {}]
  %s8 = inlined_call_operand.vmem [shape: f32[20,16], index: 8, kind: input, shape index: {}]
  %s9 = inlined_call_operand.vmem [shape: f32[512,128], index: 9, kind: input, shape index: {}]
  %s10 = inlined_call_operand.vmem [shape: f32[1,128], index: 10, kind: input, shape index: {}]
  %s11 = inlined_call_operand.vmem [shape: f32[1,128], index: 11, kind: input, shape index: {}]
  %s12 = inlined_call_operand.hbm [shape: f32[128,128], index: 12, kind: input, shape index: {}]
  %s13 = inlined_call_operand.hbm [shape: f32[12,8], index: 13, kind: input, shape index: {}]
  %s14 = inlined_call_operand.vmem [shape: f32[512,128], index: 14, kind: input, shape index: {}]
  %s15 = inlined_call_operand.vmem [shape: f32[1,128], index: 15, kind: input, shape index: {}]
  %s16 = inlined_call_operand.vmem [shape: f32[1,128], index: 16, kind: input, shape index: {}]
  %s17 = inlined_call_operand.hbm [shape: f32[128,128], index: 17, kind: input, shape index: {}]
  %s18 = inlined_call_operand.hbm [shape: f32[256,1], index: 18, kind: input, shape index: {}]
  %s19 = inlined_call_operand.<no memory space> [shape: f32[1,1], index: 19, kind: input, shape index: {}]
  %s20 = inlined_call_operand.vmem [shape: f32[2,1], index: 20, kind: output, shape index: {}]
  %s21 = sld [smem:[#allocation0]]
  $region106: #{forward.1} parent=0
    _
  %s23 = ssub.s32 1, %s21
  %s24 = scalar_select 0, %s23, %s21
  %v25 = vstv %s19
  %26 = vst [vmem:[#allocation2] sm:$0x1] %v25
  $region1: #{forward.1} parent=0
    #allocation3 [shape = 'u8[65536]{0}', space=vmem, size = 0x10000, scoped, tag = 'input window, operand 12, single buffered']
    #allocation4 [shape = 's32[1]{0}', space=sflag, size = 0x4, scoped, tag = 'scoped memory for forward.1']
    #allocation5 [shape = 'u8[8192]{0}', space=vmem, size = 0x2000, scoped, tag = 'input window, operand 13, single buffered']
    #allocation6 [shape = 's32[1]{0}', space=sflag, size = 0x4, scoped, tag = 'scoped memory for forward.1']
    #allocation7 [shape = 'u8[65536]{0}', space=vmem, size = 0x10000, scoped, tag = 'input window, operand 17, single buffered']
    #allocation8 [shape = 'u8[131072]{0}', space=vmem, size = 0x20000, scoped, tag = 'input window, operand 18, single buffered']
    #allocation9 [shape = 's32[1]{0}', space=sflag, size = 0x4, scoped, tag = 'scoped memory for forward.1']
    %27 = vsyncpa [#allocation4], 0
    %28 = vsyncpa [#allocation6], 0
    %29 = vsyncpa [#allocation9], 0
    // Predicated region
    $region2: #{forward.1} parent=1 // pred_check
      _
    $region3: #{forward.1} parent=1 // pred_check_branch
      %31 = sbr.rel (0) target = $region5
    $region4: #{forward.1} parent=1 // pred_region
      _
    $region5: #{forward.1} parent=1 // pred_fallthru
      _
    // Predicated region
    $region6: #{forward.1} parent=1 // pred_check
      _
    $region7: #{forward.1} parent=1 // pred_check_branch
      %33 = sbr.rel (0) target = $region9
    $region8: #{forward.1} parent=1 // pred_region
      _
    $region9: #{forward.1} parent=1 // pred_fallthru
      _
    // Predicated region
    $region10: #{forward.1} parent=1 // pred_check
      _
    $region11: #{forward.1} parent=1 // pred_check_branch
      %35 = sbr.rel (0) target = $region13
    $region12: #{forward.1} parent=1 // pred_region
      _
    $region13: #{forward.1} parent=1 // pred_fallthru
      _
    // Predicated region
    $region14: #{forward.1} parent=1 // pred_check
      _
    $region15: #{forward.1} parent=1 // pred_check_branch
      %37 = sbr.rel (0) target = $region17
    $region16: #{forward.1} parent=1 // pred_region
      _
    $region17: #{forward.1} parent=1 // pred_fallthru
      _
    // Predicated region
    $region18: #{forward.1} parent=1 // pred_check
      _
    $region19: #{forward.1} parent=1 // pred_check_branch
      %39 = sbr.rel (0) target = $region21
    $region20: #{forward.1} parent=1 // pred_region
      _
    $region21: #{forward.1} parent=1 // pred_fallthru
      _
    // Predicated region
    $region22: #{forward.1} parent=1 // pred_check
      _
    $region23: #{forward.1} parent=1 // pred_check_branch
      %41 = sbr.rel (0) target = $region25
    $region24: #{forward.1} parent=1 // pred_region
      _
    $region25: #{forward.1} parent=1 // pred_fallthru
      _
    // Predicated region
    $region26: #{forward.1} parent=1 // pred_check
      _
    $region27: #{forward.1} parent=1 // pred_check_branch
      %43 = sbr.rel (0) target = $region29
    $region28: #{forward.1} parent=1 // pred_region
      _
    $region29: #{forward.1} parent=1 // pred_fallthru
      _
    // Predicated region
    $region30: #{forward.1} parent=1 // pred_check
      _
    $region31: #{forward.1} parent=1 // pred_check_branch
      %45 = sbr.rel (0) target = $region33
    $region32: #{forward.1} parent=1 // pred_region
      _
    $region33: #{forward.1} parent=1 // pred_fallthru
      _
    // Predicated region
    $region34: #{forward.1} parent=1 // pred_check
      _
    $region35: #{forward.1} parent=1 // pred_check_branch
      %47 = sbr.rel (0) target = $region37
    $region36: #{forward.1} parent=1 // pred_region
      _
    $region37: #{forward.1} parent=1 // pred_fallthru
      _
    // Predicated region
    $region38: #{forward.1} parent=1 // pred_check
      _
    $region39: #{forward.1} parent=1 // pred_check_branch
      %49 = sbr.rel (0) target = $region41
    $region40: #{forward.1} parent=1 // pred_region
      _
    $region41: #{forward.1} parent=1 // pred_fallthru
      _
    // Predicated region
    $region42: #{forward.1} parent=1 // pred_check
      _
    $region43: #{forward.1} parent=1 // pred_check_branch
      %51 = sbr.rel (0) target = $region45
    $region44: #{forward.1} parent=1 // pred_region
      _
    $region45: #{forward.1} parent=1 // pred_fallthru
      _
    // Predicated region
    $region46: #{forward.1} parent=1 // pred_check
      _
    $region47: #{forward.1} parent=1 // pred_check_branch
      %53 = sbr.rel (0) target = $region49
    $region48: #{forward.1} parent=1 // pred_region
      _
    $region49: #{forward.1} parent=1 // pred_fallthru
      _
    // Predicated region
    $region50: #{forward.1} parent=1 // pred_check
      _
    $region51: #{forward.1} parent=1 // pred_check_branch
      %55 = sbr.rel (0) target = $region53
    $region52: #{forward.1} parent=1 // pred_region
      %s57 = ssub.s32 2048, 2048
      %58 = vsyncadd [#allocation4], %s57
      %s59 = sshll.u32 [#allocation3], 4
      %s60 = int_to_ptr.vmem [resolvable:$true] %s59
      %65 = dma.hbm_to_vmem [thread:$0]  %s12, 2048, %s60, [#allocation4], 128, 128, 8
    $region53: #{forward.1} parent=1 // pred_fallthru
      _
    // Predicated region
    $region54: #{forward.1} parent=1 // pred_check
      _
    $region55: #{forward.1} parent=1 // pred_check_branch
      %67 = sbr.rel (0) target = $region57
    $region56: #{forward.1} parent=1 // pred_region
      %s69 = ssub.s32 256, 256
      %70 = vsyncadd [#allocation6], %s69
      %s71 = sshll.u32 [#allocation5], 4
      %s72 = int_to_ptr.vmem [resolvable:$true] %s71
      %77 = dma.hbm_to_vmem [thread:$0]  %s13, 256, %s72, [#allocation6], 128, 128, 8
    $region57: #{forward.1} parent=1 // pred_fallthru
      _
    // Predicated region
    $region58: #{forward.1} parent=1 // pred_check
      _
    $region59: #{forward.1} parent=1 // pred_check_branch
      %79 = sbr.rel (0) target = $region61
    $region60: #{forward.1} parent=1 // pred_region
      _
    $region61: #{forward.1} parent=1 // pred_fallthru
      _
    // Predicated region
    $region62: #{forward.1} parent=1 // pred_check
      _
    $region63: #{forward.1} parent=1 // pred_check_branch
      %81 = sbr.rel (0) target = $region65
    $region64: #{forward.1} parent=1 // pred_region
      _
    $region65: #{forward.1} parent=1 // pred_fallthru
      _
    // Predicated region
    $region66: #{forward.1} parent=1 // pred_check
      _
    $region67: #{forward.1} parent=1 // pred_check_branch
      %83 = sbr.rel (0) target = $region69
    $region68: #{forward.1} parent=1 // pred_region
      _
    $region69: #{forward.1} parent=1 // pred_fallthru
      _
    // Predicated region
    $region70: #{forward.1} parent=1 // pred_check
      _
    $region71: #{forward.1} parent=1 // pred_check_branch
      %85 = sbr.rel (0) target = $region73
    $region72: #{forward.1} parent=1 // pred_region
      %s87 = ssub.s32 2048, 2048
      %88 = vsyncadd [#allocation6], %s87
      %s89 = sshll.u32 [#allocation7], 4
      %s90 = int_to_ptr.vmem [resolvable:$true] %s89
      %95 = dma.hbm_to_vmem [thread:$0]  %s17, 2048, %s90, [#allocation6], 128, 128, 8
    $region73: #{forward.1} parent=1 // pred_fallthru
      _
    // Predicated region
    $region74: #{forward.1} parent=1 // pred_check
      _
    $region75: #{forward.1} parent=1 // pred_check_branch
      %97 = sbr.rel (0) target = $region77
    $region76: #{forward.1} parent=1 // pred_region
      %s99 = ssub.s32 4096, 4096
      %100 = vsyncadd [#allocation9], %s99
      %s101 = sshll.u32 [#allocation8], 4
      %s102 = int_to_ptr.vmem [resolvable:$true] %s101
      %107 = dma.hbm_to_vmem [thread:$0]  %s18, 4096, %s102, [#allocation9], 128, 128, 8
    $region77: #{forward.1} parent=1 // pred_fallthru
      _
    // Predicated region
    $region78: #{forward.1} parent=1 // pred_check
      _
    $region79: #{forward.1} parent=1 // pred_check_branch
      %109 = sbr.rel (0) target = $region81
    $region80: #{forward.1} parent=1 // pred_region
      _
    $region81: #{forward.1} parent=1 // pred_fallthru
      _
    // Predicated region
    $region82: #{forward.1} parent=1 // pred_check
      _
    $region83: #{forward.1} parent=1 // pred_check_branch
      %111 = sbr.rel (0) target = $region85
    $region84: #{forward.1} parent=1 // pred_region
      %112 = dma.done [#allocation4], 2048
    $region85: #{forward.1} parent=1 // pred_fallthru
      _
    // Predicated region
    $region86: #{forward.1} parent=1 // pred_check
      _
    $region87: #{forward.1} parent=1 // pred_check_branch
      %114 = sbr.rel (0) target = $region89
    $region88: #{forward.1} parent=1 // pred_region
      %115 = dma.done [#allocation6], 256
    $region89: #{forward.1} parent=1 // pred_fallthru
      _
    // Predicated region
    $region90: #{forward.1} parent=1 // pred_check
      _
    $region91: #{forward.1} parent=1 // pred_check_branch
      %117 = sbr.rel (0) target = $region93
    $region92: #{forward.1} parent=1 // pred_region
      %118 = dma.done [#allocation6], 2048
    $region93: #{forward.1} parent=1 // pred_fallthru
      _
    // Predicated region
    $region94: #{forward.1} parent=1 // pred_check
      _
    $region95: #{forward.1} parent=1 // pred_check_branch
      %120 = sbr.rel (0) target = $region97
    $region96: #{forward.1} parent=1 // pred_region
      %121 = dma.done [#allocation9], 4096
    $region97: #{forward.1} parent=1 // pred_fallthru
      _
    %v122 = vld [vmem:[%s0] sm:$0xff]
    %v123 = vld [vmem:[%s0 + $0x8] sm:$0xff]
    %v124 = vld [vmem:[%s0 + $0x10] sm:$0xff]
    %v125 = vld [vmem:[%s0 + $0x18] sm:$0xff]
    %v126 = vld [vmem:[%s0 + $0x20] sm:$0x3]
    %s127 = scalar_lea.vmem %s0, 40
    %v128 = vld [vmem:[%s127] sm:$0xff]
    %v129 = vld [vmem:[%s127 + $0x8] sm:$0xff]
    %v130 = vld [vmem:[%s127 + $0x10] sm:$0xff]
    %v131 = vld [vmem:[%s127 + $0x18] sm:$0xff]
    %v132 = vld [vmem:[%s127 + $0x20] sm:$0x3]
    %vm138 = vcmask 1045504
    %v139 = vrot.slane %v122, 2
    %v140 = vrot.slane %v123, 2
    %v141 = vsel %vm138, %v139, %v140
    %v142 = vrot.slane %v124, 2
    %v143 = vsel %vm138, %v140, %v142
    %v144 = vrot.slane %v125, 2
    %v145 = vsel %vm138, %v142, %v144
    %v146 = vrot.slane %v126, 2
    %v147 = vsel %vm138, %v144, %v146
    %v157 = vrot.slane %v128, 2
    %v158 = vrot.slane %v129, 2
    %v159 = vsel %vm138, %v157, %v158
    %v160 = vrot.slane %v130, 2
    %v161 = vsel %vm138, %v158, %v160
    %v162 = vrot.slane %v131, 2
    %v163 = vsel %vm138, %v160, %v162
    %v164 = vrot.slane %v132, 2
    %v165 = vsel %vm138, %v162, %v164
    %v170 = vld [vmem:[%s1] sm:$0xff]
    %v171 = vld [vmem:[%s1 + $0x8] sm:$0xff]
    %v172 = vld [vmem:[%s1 + $0x10] sm:$0xff]
    %v173 = vld [vmem:[%s1 + $0x18] sm:$0xff]
    %v174 = vld [vmem:[%s1 + $0x20] sm:$0xff]
    %v175 = vld [vmem:[%s1 + $0x28] sm:$0xff]
    %v176 = vld [vmem:[%s1 + $0x30] sm:$0xff]
    %v177 = vld [vmem:[%s1 + $0x38] sm:$0xff]
    %v178 = vld [vmem:[%s1 + $0x40] sm:$0xff]
    %v179 = vld [vmem:[%s1 + $0x48] sm:$0xff]
    %v180 = vld [vmem:[%s1 + $0x50] sm:$0xff]
    %v181 = vld [vmem:[%s1 + $0x58] sm:$0xff]
    %v182 = vld [vmem:[%s1 + $0x60] sm:$0xff]
    %v183 = vld [vmem:[%s1 + $0x68] sm:$0xff]
    %v184 = vld [vmem:[%s1 + $0x70] sm:$0xff]
    %v185 = vld [vmem:[%s1 + $0x78] sm:$0xff]
    %v186 = vld [vmem:[%s1 + $0x80] sm:$0xff]
    %v187 = vld [vmem:[%s1 + $0x88] sm:$0xff]
    %v188 = vld [vmem:[%s1 + $0x90] sm:$0xff]
    %v189 = vld [vmem:[%s1 + $0x98] sm:$0xff]
    %v190 = vld [vmem:[%s1 + $0xa0] sm:$0xff]
    %v191 = vld [vmem:[%s1 + $0xa8] sm:$0xff]
    %v192 = vld [vmem:[%s1 + $0xb0] sm:$0xff]
    %v193 = vld [vmem:[%s1 + $0xb8] sm:$0xff]
    %v194 = vld [vmem:[%s1 + $0xc0] sm:$0xff]
    %v195 = vld [vmem:[%s1 + $0xc8] sm:$0xff]
    %v196 = vld [vmem:[%s1 + $0xd0] sm:$0xff]
    %v197 = vld [vmem:[%s1 + $0xd8] sm:$0xff]
    %v198 = vld [vmem:[%s1 + $0xe0] sm:$0xff]
    %v199 = vld [vmem:[%s1 + $0xe8] sm:$0xff]
    %v200 = vld [vmem:[%s1 + $0xf0] sm:$0xff]
    %v201 = vld [vmem:[%s1 + $0xf8] sm:$0xff]
    %v202 = vld [vmem:[%s1 + $0x100] sm:$0xff]
    %v203 = vld [vmem:[%s1 + $0x108] sm:$0xff]
    %v204 = vld [vmem:[%s1 + $0x110] sm:$0xff]
    %v205 = vld [vmem:[%s1 + $0x118] sm:$0xff]
    %v206 = vld [vmem:[%s1 + $0x120] sm:$0xff]
    %v207 = vld [vmem:[%s1 + $0x128] sm:$0xff]
    %v208 = vld [vmem:[%s1 + $0x130] sm:$0xff]
    %v209 = vld [vmem:[%s1 + $0x138] sm:$0xff]
    %v210 = vld [vmem:[%s1 + $0x140] sm:$0xff]
    %v211 = vld [vmem:[%s1 + $0x148] sm:$0xff]
    %v212 = vld [vmem:[%s1 + $0x150] sm:$0xff]
    %v213 = vld [vmem:[%s1 + $0x158] sm:$0xff]
    %v214 = vld [vmem:[%s1 + $0x160] sm:$0xff]
    %v215 = vld [vmem:[%s1 + $0x168] sm:$0xff]
    %v216 = vld [vmem:[%s1 + $0x170] sm:$0xff]
    %v217 = vld [vmem:[%s1 + $0x178] sm:$0xff]
    %v218 = vld [vmem:[%s1 + $0x180] sm:$0xff]
    %v219 = vld [vmem:[%s1 + $0x188] sm:$0xff]
    %v220 = vld [vmem:[%s1 + $0x190] sm:$0xff]
    %v221 = vld [vmem:[%s1 + $0x198] sm:$0xff]
    %v222 = vld [vmem:[%s1 + $0x1a0] sm:$0xff]
    %v223 = vld [vmem:[%s1 + $0x1a8] sm:$0xff]
    %v224 = vld [vmem:[%s1 + $0x1b0] sm:$0xff]
    %v225 = vld [vmem:[%s1 + $0x1b8] sm:$0xff]
    %v226 = vld [vmem:[%s1 + $0x1c0] sm:$0xff]
    %v227 = vld [vmem:[%s1 + $0x1c8] sm:$0xff]
    %v228 = vld [vmem:[%s1 + $0x1d0] sm:$0xff]
    %v229 = vld [vmem:[%s1 + $0x1d8] sm:$0xff]
    %v230 = vld [vmem:[%s1 + $0x1e0] sm:$0xff]
    %v231 = vld [vmem:[%s1 + $0x1e8] sm:$0xff]
    %v232 = vld [vmem:[%s1 + $0x1f0] sm:$0xff]
    %v233 = vld [vmem:[%s1 + $0x1f8] sm:$0xff]
    %v234 = vld [vmem:[%s2] sm:$0x1]
    %v236 = vlaneseq
    %v237 = vshrl.u32 %v236, 7
    %v238 = vsub.s32 0, %v237
    %v239 = vrot.slane %v234, %v238
    %241 = vmatprep.subr.mxu0 0.0
    %242 = vmatpush1.msra.mxu0 %v185
    %243 = vmatprep.subr.mxu0 0.0
    %244 = vmatpush1.msra.mxu0 %v184
    %245 = vmatprep.subr.mxu0 0.0
    %246 = vmatpush1.msra.mxu0 %v183
    %247 = vmatprep.subr.mxu0 0.0
    %248 = vmatpush1.msra.mxu0 %v182
    %249 = vmatprep.subr.mxu0 0.0
    %250 = vmatpush1.msra.mxu0 %v181
    %251 = vmatprep.subr.mxu0 0.0
    %252 = vmatpush1.msra.mxu0 %v180
    %253 = vmatprep.subr.mxu0 0.0
    %254 = vmatpush1.msra.mxu0 %v179
    %255 = vmatprep.subr.mxu0 0.0
    %256 = vmatpush1.msra.mxu0 %v178
    %257 = vmatprep.subr.mxu0 0.0
    %258 = vmatpush1.msra.mxu0 %v177
    %259 = vmatprep.subr.mxu0 0.0
    %260 = vmatpush1.msra.mxu0 %v176
    %261 = vmatprep.subr.mxu0 0.0
    %262 = vmatpush1.msra.mxu0 %v175
    %263 = vmatprep.subr.mxu0 0.0
    %264 = vmatpush1.msra.mxu0 %v174
    %265 = vmatprep.subr.mxu0 0.0
    %266 = vmatpush1.msra.mxu0 %v173
    %267 = vmatprep.subr.mxu0 0.0
    %268 = vmatpush1.msra.mxu0 %v172
    %269 = vmatprep.subr.mxu0 0.0
    %270 = vmatpush1.msra.mxu0 %v171
    %271 = vmatprep.subr.mxu0 0.0
    %272 = vmatpush1.msra.mxu0 %v170
    %273 = vmatprep.subr.mxu0 0.0
    %274 = vmatpush2.msra.mxu0 %v201
    %275 = vmatprep.subr.mxu0 0.0
    %276 = vmatpush2.msra.mxu0 %v200
    %277 = vmatprep.subr.mxu0 0.0
    %278 = vmatpush2.msra.mxu0 %v199
    %279 = vmatprep.subr.mxu0 0.0
    %280 = vmatpush2.msra.mxu0 %v198
    %281 = vmatprep.subr.mxu0 0.0
    %282 = vmatpush2.msra.mxu0 %v197
    %283 = vmatprep.subr.mxu0 0.0
    %284 = vmatpush2.msra.mxu0 %v196
    %285 = vmatprep.subr.mxu0 0.0
    %286 = vmatpush2.msra.mxu0 %v195
    %287 = vmatprep.subr.mxu0 0.0
    %288 = vmatpush2.msra.mxu0 %v194
    %289 = vmatprep.subr.mxu0 0.0
    %290 = vmatpush2.msra.mxu0 %v193
    %291 = vmatprep.subr.mxu0 0.0
    %292 = vmatpush2.msra.mxu0 %v192
    %293 = vmatprep.subr.mxu0 0.0
    %294 = vmatpush2.msra.mxu0 %v191
    %295 = vmatprep.subr.mxu0 0.0
    %296 = vmatpush2.msra.mxu0 %v190
    %297 = vmatprep.subr.mxu0 0.0
    %298 = vmatpush2.msra.mxu0 %v189
    %299 = vmatprep.subr.mxu0 0.0
    %300 = vmatpush2.msra.mxu0 %v188
    %301 = vmatprep.subr.mxu0 0.0
    %302 = vmatpush2.msra.mxu0 %v187
    %303 = vmatprep.subr.mxu0 0.0
    %304 = vmatpush2.msra.mxu0 %v186
    %305 = vmatprep.mubr.f32.mxu0 %v128
    %306 = vmatmul.mubr.f32.gmra.mxu0 %v122
    %v307 = vpop.f32.mrf.mxu0
    %v308 = vadd.f32 %v239, %v307
    %v309 = vpop.f32.mrf.mxu0
    %310 = vmatprep.mubr.f32.mxu0 %v129
    %311 = vmatmul.mubr.f32.gmra.mxu0 %v123
    %v312 = vpop.f32.mrf.mxu0
    %v313 = vadd.f32 %v239, %v312
    %v314 = vpop.f32.mrf.mxu0
    %315 = vmatprep.mubr.f32.mxu0 %v130
    %316 = vmatmul.mubr.f32.gmra.mxu0 %v124
    %v317 = vpop.f32.mrf.mxu0
    %v318 = vadd.f32 %v239, %v317
    %v319 = vpop.f32.mrf.mxu0
    %320 = vmatprep.mubr.f32.mxu0 %v131
    %321 = vmatmul.mubr.f32.gmra.mxu0 %v125
    %v322 = vpop.f32.mrf.mxu0
    %v323 = vadd.f32 %v239, %v322
    %v324 = vpop.f32.mrf.mxu0
    %325 = vdwg.mxu0
    %326 = vmatprep.subr.mxu0 0.0
    %327 = vmatpush1.msra.mxu0 %v217
    %328 = vmatprep.subr.mxu0 0.0
    %329 = vmatpush1.msra.mxu0 %v216
    %330 = vmatprep.subr.mxu0 0.0
    %331 = vmatpush1.msra.mxu0 %v215
    %332 = vmatprep.subr.mxu0 0.0
    %333 = vmatpush1.msra.mxu0 %v214
    %334 = vmatprep.subr.mxu0 0.0
    %335 = vmatpush1.msra.mxu0 %v213
    %336 = vmatprep.subr.mxu0 0.0
    %337 = vmatpush1.msra.mxu0 %v212
    %338 = vmatprep.subr.mxu0 0.0
    %339 = vmatpush1.msra.mxu0 %v211
    %340 = vmatprep.subr.mxu0 0.0
    %341 = vmatpush1.msra.mxu0 %v210
    %342 = vmatprep.subr.mxu0 0.0
    %343 = vmatpush1.msra.mxu0 %v209
    %344 = vmatprep.subr.mxu0 0.0
    %345 = vmatpush1.msra.mxu0 %v208
    %346 = vmatprep.subr.mxu0 0.0
    %347 = vmatpush1.msra.mxu0 %v207
    %348 = vmatprep.subr.mxu0 0.0
    %349 = vmatpush1.msra.mxu0 %v206
    %350 = vmatprep.subr.mxu0 0.0
    %351 = vmatpush1.msra.mxu0 %v205
    %352 = vmatprep.subr.mxu0 0.0
    %353 = vmatpush1.msra.mxu0 %v204
    %354 = vmatprep.subr.mxu0 0.0
    %355 = vmatpush1.msra.mxu0 %v203
    %356 = vmatprep.subr.mxu0 0.0
    %357 = vmatpush1.msra.mxu0 %v202
    %358 = vmatprep.subr.mxu0 0.0
    %359 = vmatpush2.msra.mxu0 %v233
    %360 = vmatprep.subr.mxu0 0.0
    %361 = vmatpush2.msra.mxu0 %v232
    %362 = vmatprep.subr.mxu0 0.0
    %363 = vmatpush2.msra.mxu0 %v231
    %364 = vmatprep.subr.mxu0 0.0
    %365 = vmatpush2.msra.mxu0 %v230
    %366 = vmatprep.subr.mxu0 0.0
    %367 = vmatpush2.msra.mxu0 %v229
    %368 = vmatprep.subr.mxu0 0.0
    %369 = vmatpush2.msra.mxu0 %v228
    %370 = vmatprep.subr.mxu0 0.0
    %371 = vmatpush2.msra.mxu0 %v227
    %372 = vmatprep.subr.mxu0 0.0
    %373 = vmatpush2.msra.mxu0 %v226
    %374 = vmatprep.subr.mxu0 0.0
    %375 = vmatpush2.msra.mxu0 %v225
    %376 = vmatprep.subr.mxu0 0.0
    %377 = vmatpush2.msra.mxu0 %v224
    %378 = vmatprep.subr.mxu0 0.0
    %379 = vmatpush2.msra.mxu0 %v223
    %380 = vmatprep.subr.mxu0 0.0
    %381 = vmatpush2.msra.mxu0 %v222
    %382 = vmatprep.subr.mxu0 0.0
    %383 = vmatpush2.msra.mxu0 %v221
    %384 = vmatprep.subr.mxu0 0.0
    %385 = vmatpush2.msra.mxu0 %v220
    %386 = vmatprep.subr.mxu0 0.0
    %387 = vmatpush2.msra.mxu0 %v219
    %388 = vmatprep.subr.mxu0 0.0
    %389 = vmatpush2.msra.mxu0 %v218
    %390 = vmatprep.mubr.f32.mxu0 %v159
    %391 = vmatmul.mubr.f32.gmra.mxu0 %v141
    %v392 = vpop.f32.mrf.mxu0
    %v393 = vadd.f32 %v308, %v392
    %v394 = vpop.f32.mrf.mxu0
    %395 = vmatprep.mubr.f32.mxu0 %v161
    %396 = vmatmul.mubr.f32.gmra.mxu0 %v143
    %v397 = vpop.f32.mrf.mxu0
    %v398 = vadd.f32 %v313, %v397
    %v399 = vpop.f32.mrf.mxu0
    %400 = vmatprep.mubr.f32.mxu0 %v163
    %401 = vmatmul.mubr.f32.gmra.mxu0 %v145
    %v402 = vpop.f32.mrf.mxu0
    %v403 = vadd.f32 %v318, %v402
    %v404 = vpop.f32.mrf.mxu0
    %405 = vmatprep.mubr.f32.mxu0 %v165
    %406 = vmatmul.mubr.f32.gmra.mxu0 %v147
    %v407 = vpop.f32.mrf.mxu0
    %v408 = vadd.f32 %v323, %v407
    %v409 = vpop.f32.mrf.mxu0
    %410 = vdwg.mxu0
    %vm411 = vcmp.ge.f32.partialorder %v393, 0.0
    %vm412 = vcmp.ge.f32.partialorder %v398, 0.0
    %vm413 = vcmp.ge.f32.partialorder %v403, 0.0
    %vm414 = vcmp.ge.f32.partialorder %v408, 0.0
    %v415 = vmul.f32 %v393, 0.2
    %v416 = vmul.f32 %v398, 0.2
    %v417 = vmul.f32 %v403, 0.2
    %v418 = vmul.f32 %v408, 0.2
    %v419 = vsel %vm411, %v393, %v415
    %v420 = vsel %vm412, %v398, %v416
    %v421 = vsel %vm413, %v403, %v417
    %v422 = vsel %vm414, %v408, %v418
    %v423 = vld [vmem:[%s3] sm:$0xff]
    %v424 = vld [vmem:[%s3 + $0x8] sm:$0xff]
    %v425 = vld [vmem:[%s3 + $0x10] sm:$0xff]
    %v426 = vld [vmem:[%s3 + $0x18] sm:$0xff]
    %v427 = vld [vmem:[%s3 + $0x20] sm:$0xf]
    %vm428 = vcmask 261120
    %v430 = vsel %vm428, %v423, 0
    %v433 = vsel %vm428, %v424, 0
    %v436 = vsel %vm428, %v425, 0
    %v439 = vsel %vm428, %v426, 0
    %v442 = vsel %vm428, %v427, 0
    %444 = vmatprep.subr.mxu0 0.0
    %445 = vmatpush1.msra.mxu0 0.0
    %446 = vmatprep.subr.mxu0 0.0
    %447 = vmatpush1.msra.mxu0 0.0
    %448 = vmatprep.subr.mxu0 0.0
    %449 = vmatpush1.msra.mxu0 0.0
    %450 = vmatprep.subr.mxu0 0.0
    %451 = vmatpush1.msra.mxu0 0.0
    %452 = vmatprep.subr.mxu0 0.0
    %453 = vmatpush1.msra.mxu0 0.0
    %454 = vmatprep.subr.mxu0 0.0
    %455 = vmatpush1.msra.mxu0 0.0
    %456 = vmatprep.subr.mxu0 0.0
    %457 = vmatpush1.msra.mxu0 0.0
    %458 = vmatprep.subr.mxu0 0.0
    %459 = vmatpush1.msra.mxu0 0.0
    %460 = vmatprep.subr.mxu0 0.0
    %461 = vmatpush1.msra.mxu0 0.0
    %462 = vmatprep.subr.mxu0 0.0
    %463 = vmatpush1.msra.mxu0 0.0
    %464 = vmatprep.subr.mxu0 0.0
    %465 = vmatpush1.msra.mxu0 0.0
    %466 = vmatprep.subr.mxu0 0.0
    %467 = vmatpush1.msra.mxu0 0.0
    %468 = vmatprep.subr.mxu0 0.0
    %469 = vmatpush1.msra.mxu0 %v422
    %470 = vmatprep.subr.mxu0 0.0
    %471 = vmatpush1.msra.mxu0 %v421
    %472 = vmatprep.subr.mxu0 0.0
    %473 = vmatpush1.msra.mxu0 %v420
    %474 = vmatprep.subr.mxu0 0.0
    %475 = vmatpush1.msra.mxu0 %v419
    %476 = vmatprep.subr.mxu0 0.0
    %477 = vmatpush2.msra.mxu0 0.0
    %478 = vmatprep.subr.mxu0 0.0
    %479 = vmatpush2.msra.mxu0 0.0
    %480 = vmatprep.subr.mxu0 0.0
    %481 = vmatpush2.msra.mxu0 0.0
    %482 = vmatprep.subr.mxu0 0.0
    %483 = vmatpush2.msra.mxu0 0.0
    %484 = vmatprep.subr.mxu0 0.0
    %485 = vmatpush2.msra.mxu0 0.0
    %486 = vmatprep.subr.mxu0 0.0
    %487 = vmatpush2.msra.mxu0 0.0
    %488 = vmatprep.subr.mxu0 0.0
    %489 = vmatpush2.msra.mxu0 0.0
    %490 = vmatprep.subr.mxu0 0.0
    %491 = vmatpush2.msra.mxu0 0.0
    %492 = vmatprep.subr.mxu0 0.0
    %493 = vmatpush2.msra.mxu0 0.0
    %494 = vmatprep.subr.mxu0 0.0
    %495 = vmatpush2.msra.mxu0 0.0
    %496 = vmatprep.subr.mxu0 0.0
    %497 = vmatpush2.msra.mxu0 0.0
    %498 = vmatprep.subr.mxu0 0.0
    %499 = vmatpush2.msra.mxu0 0.0
    %500 = vmatprep.subr.mxu0 0.0
    %501 = vmatpush2.msra.mxu0 0.0
    %502 = vmatprep.subr.mxu0 0.0
    %503 = vmatpush2.msra.mxu0 0.0
    %504 = vmatprep.subr.mxu0 0.0
    %505 = vmatpush2.msra.mxu0 0.0
    %506 = vmatprep.subr.mxu0 0.0
    %507 = vmatpush2.msra.mxu0 0.0
    %508 = vmatprep.mubr.f32.mxu0 0.0
    %509 = vmatmul.mubr.f32.gmra.mxu0 %v430
    %v510 = vpop.f32.mrf.mxu0
    %v511 = vadd.f32 0.0, %v510
    %v512 = vpop.f32.mrf.mxu0
    %513 = vmatprep.mubr.f32.mxu0 0.0
    %514 = vmatmul.mubr.f32.gmra.mxu0 %v433
    %v515 = vpop.f32.mrf.mxu0
    %v516 = vadd.f32 0.0, %v515
    %v517 = vpop.f32.mrf.mxu0
    %518 = vmatprep.mubr.f32.mxu0 0.0
    %519 = vmatmul.mubr.f32.gmra.mxu0 %v436
    %v520 = vpop.f32.mrf.mxu0
    %v521 = vadd.f32 0.0, %v520
    %v522 = vpop.f32.mrf.mxu0
    %523 = vmatprep.mubr.f32.mxu0 0.0
    %524 = vmatmul.mubr.f32.gmra.mxu0 %v439
    %v525 = vpop.f32.mrf.mxu0
    %v526 = vadd.f32 0.0, %v525
    %v527 = vpop.f32.mrf.mxu0
    %528 = vmatprep.mubr.f32.mxu0 0.0
    %529 = vmatmul.mubr.f32.gmra.mxu0 %v442
    %v530 = vpop.f32.mrf.mxu0
    %v531 = vadd.f32 0.0, %v530
    %v532 = vpop.f32.mrf.mxu0
    %533 = vdwg.mxu0
    %v537 = vrot.slane %v521, 2
    %v538 = vrot.slane %v526, 2
    %v539 = vsel %vm138, %v537, %v538
    %v540 = vrot.slane %v531, 2
    %v541 = vsel %vm138, %v538, %v540
    %v546 = vrot.slane %v511, 2
    %v547 = vrot.slane %v516, 2
    %v548 = vsel %vm138, %v546, %v547
    %v549 = vsel %vm138, %v547, %v537
    %vm552 = vcmask 1043456
    %v553 = vrot.slane %v521, 4
    %v554 = vrot.slane %v526, 4
    %v555 = vsel %vm552, %v553, %v554
    %v556 = vrot.slane %v531, 4
    %v557 = vsel %vm552, %v554, %v556
    %v560 = vld [vmem:[%s4] sm:$0xff]
    %v561 = vld [vmem:[%s4 + $0x8] sm:$0xff]
    %v562 = vld [vmem:[%s4 + $0x10] sm:$0xff]
    %v563 = vld [vmem:[%s4 + $0x18] sm:$0xff]
    %v564 = vld [vmem:[%s4 + $0x20] sm:$0xff]
    %v565 = vld [vmem:[%s4 + $0x28] sm:$0xff]
    %v566 = vld [vmem:[%s4 + $0x30] sm:$0xff]
    %v567 = vld [vmem:[%s4 + $0x38] sm:$0xff]
    %v568 = vld [vmem:[%s4 + $0x40] sm:$0xff]
    %v569 = vld [vmem:[%s4 + $0x48] sm:$0xff]
    %v570 = vld [vmem:[%s4 + $0x50] sm:$0xff]
    %v571 = vld [vmem:[%s4 + $0x58] sm:$0xff]
    %v572 = vld [vmem:[%s4 + $0x60] sm:$0xff]
    %v573 = vld [vmem:[%s4 + $0x68] sm:$0xff]
    %v574 = vld [vmem:[%s4 + $0x70] sm:$0xff]
    %v575 = vld [vmem:[%s4 + $0x78] sm:$0xff]
    %v576 = vld [vmem:[%s4 + $0x80] sm:$0xff]
    %v577 = vld [vmem:[%s4 + $0x88] sm:$0xff]
    %v578 = vld [vmem:[%s4 + $0x90] sm:$0xff]
    %v579 = vld [vmem:[%s4 + $0x98] sm:$0xff]
    %v580 = vld [vmem:[%s4 + $0xa0] sm:$0xff]
    %v581 = vld [vmem:[%s4 + $0xa8] sm:$0xff]
    %v582 = vld [vmem:[%s4 + $0xb0] sm:$0xff]
    %v583 = vld [vmem:[%s4 + $0xb8] sm:$0xff]
    %v584 = vld [vmem:[%s4 + $0xc0] sm:$0xff]
    %v585 = vld [vmem:[%s4 + $0xc8] sm:$0xff]
    %v586 = vld [vmem:[%s4 + $0xd0] sm:$0xff]
    %v587 = vld [vmem:[%s4 + $0xd8] sm:$0xff]
    %v588 = vld [vmem:[%s4 + $0xe0] sm:$0xff]
    %v589 = vld [vmem:[%s4 + $0xe8] sm:$0xff]
    %v590 = vld [vmem:[%s4 + $0xf0] sm:$0xff]
    %v591 = vld [vmem:[%s4 + $0xf8] sm:$0xff]
    %v592 = vld [vmem:[%s4 + $0x100] sm:$0xff]
    %v593 = vld [vmem:[%s4 + $0x108] sm:$0xff]
    %v594 = vld [vmem:[%s4 + $0x110] sm:$0xff]
    %v595 = vld [vmem:[%s4 + $0x118] sm:$0xff]
    %v596 = vld [vmem:[%s4 + $0x120] sm:$0xff]
    %v597 = vld [vmem:[%s4 + $0x128] sm:$0xff]
    %v598 = vld [vmem:[%s4 + $0x130] sm:$0xff]
    %v599 = vld [vmem:[%s4 + $0x138] sm:$0xff]
    %v600 = vld [vmem:[%s4 + $0x140] sm:$0xff]
    %v601 = vld [vmem:[%s4 + $0x148] sm:$0xff]
    %v602 = vld [vmem:[%s4 + $0x150] sm:$0xff]
    %v603 = vld [vmem:[%s4 + $0x158] sm:$0xff]
    %v604 = vld [vmem:[%s4 + $0x160] sm:$0xff]
    %v605 = vld [vmem:[%s4 + $0x168] sm:$0xff]
    %v606 = vld [vmem:[%s4 + $0x170] sm:$0xff]
    %v607 = vld [vmem:[%s4 + $0x178] sm:$0xff]
    %v608 = vld [vmem:[%s4 + $0x180] sm:$0xff]
    %v609 = vld [vmem:[%s4 + $0x188] sm:$0xff]
    %v610 = vld [vmem:[%s4 + $0x190] sm:$0xff]
    %v611 = vld [vmem:[%s4 + $0x198] sm:$0xff]
    %v612 = vld [vmem:[%s4 + $0x1a0] sm:$0xff]
    %v613 = vld [vmem:[%s4 + $0x1a8] sm:$0xff]
    %v614 = vld [vmem:[%s4 + $0x1b0] sm:$0xff]
    %v615 = vld [vmem:[%s4 + $0x1b8] sm:$0xff]
    %v616 = vld [vmem:[%s4 + $0x1c0] sm:$0xff]
    %v617 = vld [vmem:[%s4 + $0x1c8] sm:$0xff]
    %v618 = vld [vmem:[%s4 + $0x1d0] sm:$0xff]
    %v619 = vld [vmem:[%s4 + $0x1d8] sm:$0xff]
    %v620 = vld [vmem:[%s4 + $0x1e0] sm:$0xff]
    %v621 = vld [vmem:[%s4 + $0x1e8] sm:$0xff]
    %v622 = vld [vmem:[%s4 + $0x1f0] sm:$0xff]
    %v623 = vld [vmem:[%s4 + $0x1f8] sm:$0xff]
    %624 = vmatprep.subr.mxu0 0.0
    %625 = vmatpush1.msra.mxu0 %v575
    %626 = vmatprep.subr.mxu0 0.0
    %627 = vmatpush1.msra.mxu0 %v574
    %628 = vmatprep.subr.mxu0 0.0
    %629 = vmatpush1.msra.mxu0 %v573
    %630 = vmatprep.subr.mxu0 0.0
    %631 = vmatpush1.msra.mxu0 %v572
    %632 = vmatprep.subr.mxu0 0.0
    %633 = vmatpush1.msra.mxu0 %v571
    %634 = vmatprep.subr.mxu0 0.0
    %635 = vmatpush1.msra.mxu0 %v570
    %636 = vmatprep.subr.mxu0 0.0
    %637 = vmatpush1.msra.mxu0 %v569
    %638 = vmatprep.subr.mxu0 0.0
    %639 = vmatpush1.msra.mxu0 %v568
    %640 = vmatprep.subr.mxu0 0.0
    %641 = vmatpush1.msra.mxu0 %v567
    %642 = vmatprep.subr.mxu0 0.0
    %643 = vmatpush1.msra.mxu0 %v566
    %644 = vmatprep.subr.mxu0 0.0
    %645 = vmatpush1.msra.mxu0 %v565
    %646 = vmatprep.subr.mxu0 0.0
    %647 = vmatpush1.msra.mxu0 %v564
    %648 = vmatprep.subr.mxu0 0.0
    %649 = vmatpush1.msra.mxu0 %v563
    %650 = vmatprep.subr.mxu0 0.0
    %651 = vmatpush1.msra.mxu0 %v562
    %652 = vmatprep.subr.mxu0 0.0
    %653 = vmatpush1.msra.mxu0 %v561
    %654 = vmatprep.subr.mxu0 0.0
    %655 = vmatpush1.msra.mxu0 %v560
    %656 = vmatprep.subr.mxu0 0.0
    %657 = vmatpush2.msra.mxu0 %v591
    %658 = vmatprep.subr.mxu0 0.0
    %659 = vmatpush2.msra.mxu0 %v590
    %660 = vmatprep.subr.mxu0 0.0
    %661 = vmatpush2.msra.mxu0 %v589
    %662 = vmatprep.subr.mxu0 0.0
    %663 = vmatpush2.msra.mxu0 %v588
    %664 = vmatprep.subr.mxu0 0.0
    %665 = vmatpush2.msra.mxu0 %v587
    %666 = vmatprep.subr.mxu0 0.0
    %667 = vmatpush2.msra.mxu0 %v586
    %668 = vmatprep.subr.mxu0 0.0
    %669 = vmatpush2.msra.mxu0 %v585
    %670 = vmatprep.subr.mxu0 0.0
    %671 = vmatpush2.msra.mxu0 %v584
    %672 = vmatprep.subr.mxu0 0.0
    %673 = vmatpush2.msra.mxu0 %v583
    %674 = vmatprep.subr.mxu0 0.0
    %675 = vmatpush2.msra.mxu0 %v582
    %676 = vmatprep.subr.mxu0 0.0
    %677 = vmatpush2.msra.mxu0 %v581
    %678 = vmatprep.subr.mxu0 0.0
    %679 = vmatpush2.msra.mxu0 %v580
    %680 = vmatprep.subr.mxu0 0.0
    %681 = vmatpush2.msra.mxu0 %v579
    %682 = vmatprep.subr.mxu0 0.0
    %683 = vmatpush2.msra.mxu0 %v578
    %684 = vmatprep.subr.mxu0 0.0
    %685 = vmatpush2.msra.mxu0 %v577
    %686 = vmatprep.subr.mxu0 0.0
    %687 = vmatpush2.msra.mxu0 %v576
    %688 = vmatprep.mubr.f32.mxu0 %v539
    %689 = vmatmul.mubr.f32.gmra.mxu0 %v511
    %v690 = vpop.f32.mrf.mxu0
    %v691 = vadd.f32 0.0, %v690
    %v692 = vpop.f32.mrf.mxu0
    %693 = vmatprep.mubr.f32.mxu0 %v541
    %694 = vmatmul.mubr.f32.gmra.mxu0 %v516
    %v695 = vpop.f32.mrf.mxu0
    %v696 = vadd.f32 0.0, %v695
    %v697 = vpop.f32.mrf.mxu0
    %698 = vdwg.mxu0
    %699 = vmatprep.subr.mxu0 0.0
    %700 = vmatpush1.msra.mxu0 %v607
    %701 = vmatprep.subr.mxu0 0.0
    %702 = vmatpush1.msra.mxu0 %v606
    %703 = vmatprep.subr.mxu0 0.0
    %704 = vmatpush1.msra.mxu0 %v605
    %705 = vmatprep.subr.mxu0 0.0
    %706 = vmatpush1.msra.mxu0 %v604
    %707 = vmatprep.subr.mxu0 0.0
    %708 = vmatpush1.msra.mxu0 %v603
    %709 = vmatprep.subr.mxu0 0.0
    %710 = vmatpush1.msra.mxu0 %v602
    %711 = vmatprep.subr.mxu0 0.0
    %712 = vmatpush1.msra.mxu0 %v601
    %713 = vmatprep.subr.mxu0 0.0
    %714 = vmatpush1.msra.mxu0 %v600
    %715 = vmatprep.subr.mxu0 0.0
    %716 = vmatpush1.msra.mxu0 %v599
    %717 = vmatprep.subr.mxu0 0.0
    %718 = vmatpush1.msra.mxu0 %v598
    %719 = vmatprep.subr.mxu0 0.0
    %720 = vmatpush1.msra.mxu0 %v597
    %721 = vmatprep.subr.mxu0 0.0
    %722 = vmatpush1.msra.mxu0 %v596
    %723 = vmatprep.subr.mxu0 0.0
    %724 = vmatpush1.msra.mxu0 %v595
    %725 = vmatprep.subr.mxu0 0.0
    %726 = vmatpush1.msra.mxu0 %v594
    %727 = vmatprep.subr.mxu0 0.0
    %728 = vmatpush1.msra.mxu0 %v593
    %729 = vmatprep.subr.mxu0 0.0
    %730 = vmatpush1.msra.mxu0 %v592
    %731 = vmatprep.subr.mxu0 0.0
    %732 = vmatpush2.msra.mxu0 %v623
    %733 = vmatprep.subr.mxu0 0.0
    %734 = vmatpush2.msra.mxu0 %v622
    %735 = vmatprep.subr.mxu0 0.0
    %736 = vmatpush2.msra.mxu0 %v621
    %737 = vmatprep.subr.mxu0 0.0
    %738 = vmatpush2.msra.mxu0 %v620
    %739 = vmatprep.subr.mxu0 0.0
    %740 = vmatpush2.msra.mxu0 %v619
    %741 = vmatprep.subr.mxu0 0.0
    %742 = vmatpush2.msra.mxu0 %v618
    %743 = vmatprep.subr.mxu0 0.0
    %744 = vmatpush2.msra.mxu0 %v617
    %745 = vmatprep.subr.mxu0 0.0
    %746 = vmatpush2.msra.mxu0 %v616
    %747 = vmatprep.subr.mxu0 0.0
    %748 = vmatpush2.msra.mxu0 %v615
    %749 = vmatprep.subr.mxu0 0.0
    %750 = vmatpush2.msra.mxu0 %v614
    %751 = vmatprep.subr.mxu0 0.0
    %752 = vmatpush2.msra.mxu0 %v613
    %753 = vmatprep.subr.mxu0 0.0
    %754 = vmatpush2.msra.mxu0 %v612
    %755 = vmatprep.subr.mxu0 0.0
    %756 = vmatpush2.msra.mxu0 %v611
    %757 = vmatprep.subr.mxu0 0.0
    %758 = vmatpush2.msra.mxu0 %v610
    %759 = vmatprep.subr.mxu0 0.0
    %760 = vmatpush2.msra.mxu0 %v609
    %761 = vmatprep.subr.mxu0 0.0
    %762 = vmatpush2.msra.mxu0 %v608
    %763 = vmatprep.mubr.f32.mxu0 %v555
    %764 = vmatmul.mubr.f32.gmra.mxu0 %v548
    %v765 = vpop.f32.mrf.mxu0
    %v766 = vadd.f32 %v691, %v765
    %v767 = vpop.f32.mrf.mxu0
    %768 = vmatprep.mubr.f32.mxu0 %v557
    %769 = vmatmul.mubr.f32.gmra.mxu0 %v549
    %v770 = vpop.f32.mrf.mxu0
    %v771 = vadd.f32 %v696, %v770
    %v772 = vpop.f32.mrf.mxu0
    %773 = vdwg.mxu0
    %v774 = vadd.f32 %v766, %v771
    %v775 = vrot.slane %v774, 4
    %v776 = vadd.f32 %v774, %v775
    %v777 = vrot.slane %v776, 2
    %v778 = vadd.f32 %v776, %v777
    %v779 = vrot.slane %v778, 1
    %v780 = vadd.f32 %v778, %v779
    %v781 = vrcp.pop 16.0
    %v782 = vmul.f32 %v780, %v781
    %v783 = vmul.f32 %v766, %v766
    %v784 = vmul.f32 %v771, %v771
    %v785 = vadd.f32 %v783, %v784
    %v786 = vrot.slane %v785, 4
    %v787 = vadd.f32 %v785, %v786
    %v788 = vrot.slane %v787, 2
    %v789 = vadd.f32 %v787, %v788
    %v790 = vrot.slane %v789, 1
    %v791 = vadd.f32 %v789, %v790
    %v792 = vmul.f32 %v791, %v781
    %vm793 = vcmask 1040384
    %v794 = vsel %vm793, %v782, %v792
    %v795 = vld [vmem:[%s7] sm:$0xff]
    %v796 = vld [vmem:[%s7 + $0x8] sm:$0xff]
    %v797 = vld [vmem:[%s7 + $0x10] sm:$0xff]
    %v798 = vld [vmem:[%s7 + $0x18] sm:$0xff]
    %v799 = vld [vmem:[%s7 + $0x20] sm:$0xff]
    %v800 = vld [vmem:[%s7 + $0x28] sm:$0xff]
    %v801 = vld [vmem:[%s7 + $0x30] sm:$0xff]
    %v802 = vld [vmem:[%s7 + $0x38] sm:$0xff]
    %v803 = vld [vmem:[%s7 + $0x40] sm:$0xff]
    %v804 = vld [vmem:[%s7 + $0x48] sm:$0xff]
    %v805 = vld [vmem:[%s7 + $0x50] sm:$0xff]
    %v806 = vld [vmem:[%s7 + $0x58] sm:$0xff]
    %v807 = vld [vmem:[%s7 + $0x60] sm:$0xff]
    %v808 = vld [vmem:[%s7 + $0x68] sm:$0xff]
    %v809 = vld [vmem:[%s7 + $0x70] sm:$0xff]
    %v810 = vld [vmem:[%s7 + $0x78] sm:$0xff]
    %811 = vmatprep.subr.mxu0 0.0
    %812 = vmatpush1.msra.mxu0 %v810
    %813 = vmatprep.subr.mxu0 0.0
    %814 = vmatpush1.msra.mxu0 %v809
    %815 = vmatprep.subr.mxu0 0.0
    %816 = vmatpush1.msra.mxu0 %v808
    %817 = vmatprep.subr.mxu0 0.0
    %818 = vmatpush1.msra.mxu0 %v807
    %819 = vmatprep.subr.mxu0 0.0
    %820 = vmatpush1.msra.mxu0 %v806
    %821 = vmatprep.subr.mxu0 0.0
    %822 = vmatpush1.msra.mxu0 %v805
    %823 = vmatprep.subr.mxu0 0.0
    %824 = vmatpush1.msra.mxu0 %v804
    %825 = vmatprep.subr.mxu0 0.0
    %826 = vmatpush1.msra.mxu0 %v803
    %827 = vmatprep.subr.mxu0 0.0
    %828 = vmatpush1.msra.mxu0 %v802
    %829 = vmatprep.subr.mxu0 0.0
    %830 = vmatpush1.msra.mxu0 %v801
    %831 = vmatprep.subr.mxu0 0.0
    %832 = vmatpush1.msra.mxu0 %v800
    %833 = vmatprep.subr.mxu0 0.0
    %834 = vmatpush1.msra.mxu0 %v799
    %835 = vmatprep.subr.mxu0 0.0
    %836 = vmatpush1.msra.mxu0 %v798
    %837 = vmatprep.subr.mxu0 0.0
    %838 = vmatpush1.msra.mxu0 %v797
    %839 = vmatprep.subr.mxu0 0.0
    %840 = vmatpush1.msra.mxu0 %v796
    %841 = vmatprep.subr.mxu0 0.0
    %842 = vmatpush1.msra.mxu0 %v795
    %843 = vmatprep.subr.mxu0 0.0
    %844 = vmatpush2.msra.mxu0 0.0
    %845 = vmatprep.subr.mxu0 0.0
    %846 = vmatpush2.msra.mxu0 0.0
    %847 = vmatprep.subr.mxu0 0.0
    %848 = vmatpush2.msra.mxu0 0.0
    %849 = vmatprep.subr.mxu0 0.0
    %850 = vmatpush2.msra.mxu0 0.0
    %851 = vmatprep.subr.mxu0 0.0
    %852 = vmatpush2.msra.mxu0 0.0
    %853 = vmatprep.subr.mxu0 0.0
    %854 = vmatpush2.msra.mxu0 0.0
    %855 = vmatprep.subr.mxu0 0.0
    %856 = vmatpush2.msra.mxu0 0.0
    %857 = vmatprep.subr.mxu0 0.0
    %858 = vmatpush2.msra.mxu0 0.0
    %859 = vmatprep.subr.mxu0 0.0
    %860 = vmatpush2.msra.mxu0 0.0
    %861 = vmatprep.subr.mxu0 0.0
    %862 = vmatpush2.msra.mxu0 0.0
    %863 = vmatprep.subr.mxu0 0.0
    %864 = vmatpush2.msra.mxu0 0.0
    %865 = vmatprep.subr.mxu0 0.0
    %866 = vmatpush2.msra.mxu0 0.0
    %867 = vmatprep.subr.mxu0 0.0
    %868 = vmatpush2.msra.mxu0 0.0
    %869 = vmatprep.subr.mxu0 0.0
    %870 = vmatpush2.msra.mxu0 0.0
    %871 = vmatprep.subr.mxu0 0.0
    %872 = vmatpush2.msra.mxu0 0.0
    %873 = vmatprep.subr.mxu0 0.0
    %874 = vmatpush2.msra.mxu0 0.0
    %875 = vmatprep.mubr.f32.mxu0 0.0
    %876 = vmatmul.mubr.f32.gmra.mxu0 %v794
    %v877 = vpop.f32.mrf.mxu0
    %v878 = vadd.f32 0.0, %v877
    %v879 = vpop.f32.mrf.mxu0
    %880 = vdwg.mxu0
    %v881 = vmul.f32 %v878, %v878
    %v883 = vrot.slane %v881, 7
    %v885 = vsub.f32 %v878, %v883
    %v886 = vld [vmem:[%s5] sm:$0x1]
    %v887 = vadd.f32 %v885, 1e-05
    %v888 = vrsqrt.pop %v887
    %v891 = vunpack.c.l.s4 1966171168
    %v892 = vunpack.c.0.s8 %v891
    %v893 = vlaneseq
    %v894 = vshrl.u32 %v893, 7
    %v895 = vsub.s32 %v892, %v894
    %v896 = vrot.slane %v888, %v895
    %v897 = vcombine.high %v896, %v896
    %v899 = vunpack.c.l.s4 1966171168
    %v900 = vunpack.c.0.s8 %v899
    %v901 = vlaneseq
    %v902 = vshrl.u32 %v901, 7
    %v903 = vsub.s32 %v900, %v902
    %v904 = vrot.slane %v897, %v903
    %v906 = vmul.f32 %v886, %v904
    %v907 = vlaneseq
    %v908 = vshrl.u32 %v907, 7
    %v909 = vsub.s32 0, %v908
    %v910 = vrot.slane %v878, %v909
    %v911 = vsub.f32 %v766, %v910
    %v912 = vsub.f32 %v771, %v910
    %v914 = vlaneseq
    %v915 = vshrl.u32 %v914, 7
    %v916 = vsub.s32 0, %v915
    %v917 = vrot.slane %v906, %v916
    %v919 = vmul.f32 %v911, %v917
    %v920 = vmul.f32 %v912, %v917
    %v921 = vld [vmem:[%s6] sm:$0x1]
    %v923 = vlaneseq
    %v924 = vshrl.u32 %v923, 7
    %v925 = vsub.s32 0, %v924
    %v926 = vrot.slane %v921, %v925
    %v928 = vadd.f32 %v919, %v926
    %v929 = vadd.f32 %v920, %v926
    %vm930 = vcmp.ge.f32.partialorder %v928, 0.0
    %vm931 = vcmp.ge.f32.partialorder %v929, 0.0
    %v932 = vmul.f32 %v928, 0.2
    %v933 = vmul.f32 %v929, 0.2
    %v934 = vsel %vm930, %v928, %v932
    %v935 = vsel %vm931, %v929, %v933
    %v936 = vld [vmem:[%s8] sm:$0xff]
    %v937 = vld [vmem:[%s8 + $0x8] sm:$0xff]
    %v938 = vld [vmem:[%s8 + $0x10] sm:$0xf]
    %vm939 = vcmask 130048
    %v941 = vsel %vm939, %v936, 0
    %v944 = vsel %vm939, %v937, 0
    %v947 = vsel %vm939, %v938, 0
    %949 = vmatprep.subr.mxu0 0.0
    %950 = vmatpush1.msra.mxu0 0.0
    %951 = vmatprep.subr.mxu0 0.0
    %952 = vmatpush1.msra.mxu0 0.0
    %953 = vmatprep.subr.mxu0 0.0
    %954 = vmatpush1.msra.mxu0 0.0
    %955 = vmatprep.subr.mxu0 0.0
    %956 = vmatpush1.msra.mxu0 0.0
    %957 = vmatprep.subr.mxu0 0.0
    %958 = vmatpush1.msra.mxu0 0.0
    %959 = vmatprep.subr.mxu0 0.0
    %960 = vmatpush1.msra.mxu0 0.0
    %961 = vmatprep.subr.mxu0 0.0
    %962 = vmatpush1.msra.mxu0 0.0
    %963 = vmatprep.subr.mxu0 0.0
    %964 = vmatpush1.msra.mxu0 0.0
    %965 = vmatprep.subr.mxu0 0.0
    %966 = vmatpush1.msra.mxu0 0.0
    %967 = vmatprep.subr.mxu0 0.0
    %968 = vmatpush1.msra.mxu0 0.0
    %969 = vmatprep.subr.mxu0 0.0
    %970 = vmatpush1.msra.mxu0 0.0
    %971 = vmatprep.subr.mxu0 0.0
    %972 = vmatpush1.msra.mxu0 0.0
    %973 = vmatprep.subr.mxu0 0.0
    %974 = vmatpush1.msra.mxu0 0.0
    %975 = vmatprep.subr.mxu0 0.0
    %976 = vmatpush1.msra.mxu0 0.0
    %977 = vmatprep.subr.mxu0 0.0
    %978 = vmatpush1.msra.mxu0 %v935
    %979 = vmatprep.subr.mxu0 0.0
    %980 = vmatpush1.msra.mxu0 %v934
    %981 = vmatprep.subr.mxu0 0.0
    %982 = vmatpush2.msra.mxu0 0.0
    %983 = vmatprep.subr.mxu0 0.0
    %984 = vmatpush2.msra.mxu0 0.0
    %985 = vmatprep.subr.mxu0 0.0
    %986 = vmatpush2.msra.mxu0 0.0
    %987 = vmatprep.subr.mxu0 0.0
    %988 = vmatpush2.msra.mxu0 0.0
    %989 = vmatprep.subr.mxu0 0.0
    %990 = vmatpush2.msra.mxu0 0.0
    %991 = vmatprep.subr.mxu0 0.0
    %992 = vmatpush2.msra.mxu0 0.0
    %993 = vmatprep.subr.mxu0 0.0
    %994 = vmatpush2.msra.mxu0 0.0
    %995 = vmatprep.subr.mxu0 0.0
    %996 = vmatpush2.msra.mxu0 0.0
    %997 = vmatprep.subr.mxu0 0.0
    %998 = vmatpush2.msra.mxu0 0.0
    %999 = vmatprep.subr.mxu0 0.0
    %1000 = vmatpush2.msra.mxu0 0.0
    %1001 = vmatprep.subr.mxu0 0.0
    %1002 = vmatpush2.msra.mxu0 0.0
    %1003 = vmatprep.subr.mxu0 0.0
    %1004 = vmatpush2.msra.mxu0 0.0
    %1005 = vmatprep.subr.mxu0 0.0
    %1006 = vmatpush2.msra.mxu0 0.0
    %1007 = vmatprep.subr.mxu0 0.0
    %1008 = vmatpush2.msra.mxu0 0.0
    %1009 = vmatprep.subr.mxu0 0.0
    %1010 = vmatpush2.msra.mxu0 0.0
    %1011 = vmatprep.subr.mxu0 0.0
    %1012 = vmatpush2.msra.mxu0 0.0
    %1013 = vmatprep.mubr.f32.mxu0 0.0
    %1014 = vmatmul.mubr.f32.gmra.mxu0 %v941
    %v1015 = vpop.f32.mrf.mxu0
    %v1016 = vadd.f32 0.0, %v1015
    %v1017 = vpop.f32.mrf.mxu0
    %1018 = vmatprep.mubr.f32.mxu0 0.0
    %1019 = vmatmul.mubr.f32.gmra.mxu0 %v944
    %v1020 = vpop.f32.mrf.mxu0
    %v1021 = vadd.f32 0.0, %v1020
    %v1022 = vpop.f32.mrf.mxu0
    %1023 = vmatprep.mubr.f32.mxu0 0.0
    %1024 = vmatmul.mubr.f32.gmra.mxu0 %v947
    %v1025 = vpop.f32.mrf.mxu0
    %v1026 = vadd.f32 0.0, %v1025
    %v1027 = vpop.f32.mrf.mxu0
    %1028 = vdwg.mxu0
    %v1031 = vrot.slane %v1021, 2
    %v1032 = vrot.slane %v1026, 2
    %v1033 = vsel %vm138, %v1031, %v1032
    %v1036 = vrot.slane %v1016, 2
    %v1037 = vsel %vm138, %v1036, %v1031
    %v1039 = vrot.slane %v1021, 4
    %v1040 = vrot.slane %v1026, 4
    %v1041 = vsel %vm552, %v1039, %v1040
    %v1043 = vld [vmem:[%s9] sm:$0xff]
    %v1044 = vld [vmem:[%s9 + $0x8] sm:$0xff]
    %v1045 = vld [vmem:[%s9 + $0x10] sm:$0xff]
    %v1046 = vld [vmem:[%s9 + $0x18] sm:$0xff]
    %v1047 = vld [vmem:[%s9 + $0x20] sm:$0xff]
    %v1048 = vld [vmem:[%s9 + $0x28] sm:$0xff]
    %v1049 = vld [vmem:[%s9 + $0x30] sm:$0xff]
    %v1050 = vld [vmem:[%s9 + $0x38] sm:$0xff]
    %v1051 = vld [vmem:[%s9 + $0x40] sm:$0xff]
    %v1052 = vld [vmem:[%s9 + $0x48] sm:$0xff]
    %v1053 = vld [vmem:[%s9 + $0x50] sm:$0xff]
    %v1054 = vld [vmem:[%s9 + $0x58] sm:$0xff]
    %v1055 = vld [vmem:[%s9 + $0x60] sm:$0xff]
    %v1056 = vld [vmem:[%s9 + $0x68] sm:$0xff]
    %v1057 = vld [vmem:[%s9 + $0x70] sm:$0xff]
    %v1058 = vld [vmem:[%s9 + $0x78] sm:$0xff]
    %v1059 = vld [vmem:[%s9 + $0x80] sm:$0xff]
    %v1060 = vld [vmem:[%s9 + $0x88] sm:$0xff]
    %v1061 = vld [vmem:[%s9 + $0x90] sm:$0xff]
    %v1062 = vld [vmem:[%s9 + $0x98] sm:$0xff]
    %v1063 = vld [vmem:[%s9 + $0xa0] sm:$0xff]
    %v1064 = vld [vmem:[%s9 + $0xa8] sm:$0xff]
    %v1065 = vld [vmem:[%s9 + $0xb0] sm:$0xff]
    %v1066 = vld [vmem:[%s9 + $0xb8] sm:$0xff]
    %v1067 = vld [vmem:[%s9 + $0xc0] sm:$0xff]
    %v1068 = vld [vmem:[%s9 + $0xc8] sm:$0xff]
    %v1069 = vld [vmem:[%s9 + $0xd0] sm:$0xff]
    %v1070 = vld [vmem:[%s9 + $0xd8] sm:$0xff]
    %v1071 = vld [vmem:[%s9 + $0xe0] sm:$0xff]
    %v1072 = vld [vmem:[%s9 + $0xe8] sm:$0xff]
    %v1073 = vld [vmem:[%s9 + $0xf0] sm:$0xff]
    %v1074 = vld [vmem:[%s9 + $0xf8] sm:$0xff]
    %v1075 = vld [vmem:[%s9 + $0x100] sm:$0xff]
    %v1076 = vld [vmem:[%s9 + $0x108] sm:$0xff]
    %v1077 = vld [vmem:[%s9 + $0x110] sm:$0xff]
    %v1078 = vld [vmem:[%s9 + $0x118] sm:$0xff]
    %v1079 = vld [vmem:[%s9 + $0x120] sm:$0xff]
    %v1080 = vld [vmem:[%s9 + $0x128] sm:$0xff]
    %v1081 = vld [vmem:[%s9 + $0x130] sm:$0xff]
    %v1082 = vld [vmem:[%s9 + $0x138] sm:$0xff]
    %v1083 = vld [vmem:[%s9 + $0x140] sm:$0xff]
    %v1084 = vld [vmem:[%s9 + $0x148] sm:$0xff]
    %v1085 = vld [vmem:[%s9 + $0x150] sm:$0xff]
    %v1086 = vld [vmem:[%s9 + $0x158] sm:$0xff]
    %v1087 = vld [vmem:[%s9 + $0x160] sm:$0xff]
    %v1088 = vld [vmem:[%s9 + $0x168] sm:$0xff]
    %v1089 = vld [vmem:[%s9 + $0x170] sm:$0xff]
    %v1090 = vld [vmem:[%s9 + $0x178] sm:$0xff]
    %v1091 = vld [vmem:[%s9 + $0x180] sm:$0xff]
    %v1092 = vld [vmem:[%s9 + $0x188] sm:$0xff]
    %v1093 = vld [vmem:[%s9 + $0x190] sm:$0xff]
    %v1094 = vld [vmem:[%s9 + $0x198] sm:$0xff]
    %v1095 = vld [vmem:[%s9 + $0x1a0] sm:$0xff]
    %v1096 = vld [vmem:[%s9 + $0x1a8] sm:$0xff]
    %v1097 = vld [vmem:[%s9 + $0x1b0] sm:$0xff]
    %v1098 = vld [vmem:[%s9 + $0x1b8] sm:$0xff]
    %v1099 = vld [vmem:[%s9 + $0x1c0] sm:$0xff]
    %v1100 = vld [vmem:[%s9 + $0x1c8] sm:$0xff]
    %v1101 = vld [vmem:[%s9 + $0x1d0] sm:$0xff]
    %v1102 = vld [vmem:[%s9 + $0x1d8] sm:$0xff]
    %v1103 = vld [vmem:[%s9 + $0x1e0] sm:$0xff]
    %v1104 = vld [vmem:[%s9 + $0x1e8] sm:$0xff]
    %v1105 = vld [vmem:[%s9 + $0x1f0] sm:$0xff]
    %v1106 = vld [vmem:[%s9 + $0x1f8] sm:$0xff]
    %1107 = vmatprep.subr.mxu0 0.0
    %1108 = vmatpush1.msra.mxu0 %v1058
    %1109 = vmatprep.subr.mxu0 0.0
    %1110 = vmatpush1.msra.mxu0 %v1057
    %1111 = vmatprep.subr.mxu0 0.0
    %1112 = vmatpush1.msra.mxu0 %v1056
    %1113 = vmatprep.subr.mxu0 0.0
    %1114 = vmatpush1.msra.mxu0 %v1055
    %1115 = vmatprep.subr.mxu0 0.0
    %1116 = vmatpush1.msra.mxu0 %v1054
    %1117 = vmatprep.subr.mxu0 0.0
    %1118 = vmatpush1.msra.mxu0 %v1053
    %1119 = vmatprep.subr.mxu0 0.0
    %1120 = vmatpush1.msra.mxu0 %v1052
    %1121 = vmatprep.subr.mxu0 0.0
    %1122 = vmatpush1.msra.mxu0 %v1051
    %1123 = vmatprep.subr.mxu0 0.0
    %1124 = vmatpush1.msra.mxu0 %v1050
    %1125 = vmatprep.subr.mxu0 0.0
    %1126 = vmatpush1.msra.mxu0 %v1049
    %1127 = vmatprep.subr.mxu0 0.0
    %1128 = vmatpush1.msra.mxu0 %v1048
    %1129 = vmatprep.subr.mxu0 0.0
    %1130 = vmatpush1.msra.mxu0 %v1047
    %1131 = vmatprep.subr.mxu0 0.0
    %1132 = vmatpush1.msra.mxu0 %v1046
    %1133 = vmatprep.subr.mxu0 0.0
    %1134 = vmatpush1.msra.mxu0 %v1045
    %1135 = vmatprep.subr.mxu0 0.0
    %1136 = vmatpush1.msra.mxu0 %v1044
    %1137 = vmatprep.subr.mxu0 0.0
    %1138 = vmatpush1.msra.mxu0 %v1043
    %1139 = vmatprep.subr.mxu0 0.0
    %1140 = vmatpush2.msra.mxu0 %v1074
    %1141 = vmatprep.subr.mxu0 0.0
    %1142 = vmatpush2.msra.mxu0 %v1073
    %1143 = vmatprep.subr.mxu0 0.0
    %1144 = vmatpush2.msra.mxu0 %v1072
    %1145 = vmatprep.subr.mxu0 0.0
    %1146 = vmatpush2.msra.mxu0 %v1071
    %1147 = vmatprep.subr.mxu0 0.0
    %1148 = vmatpush2.msra.mxu0 %v1070
    %1149 = vmatprep.subr.mxu0 0.0
    %1150 = vmatpush2.msra.mxu0 %v1069
    %1151 = vmatprep.subr.mxu0 0.0
    %1152 = vmatpush2.msra.mxu0 %v1068
    %1153 = vmatprep.subr.mxu0 0.0
    %1154 = vmatpush2.msra.mxu0 %v1067
    %1155 = vmatprep.subr.mxu0 0.0
    %1156 = vmatpush2.msra.mxu0 %v1066
    %1157 = vmatprep.subr.mxu0 0.0
    %1158 = vmatpush2.msra.mxu0 %v1065
    %1159 = vmatprep.subr.mxu0 0.0
    %1160 = vmatpush2.msra.mxu0 %v1064
    %1161 = vmatprep.subr.mxu0 0.0
    %1162 = vmatpush2.msra.mxu0 %v1063
    %1163 = vmatprep.subr.mxu0 0.0
    %1164 = vmatpush2.msra.mxu0 %v1062
    %1165 = vmatprep.subr.mxu0 0.0
    %1166 = vmatpush2.msra.mxu0 %v1061
    %1167 = vmatprep.subr.mxu0 0.0
    %1168 = vmatpush2.msra.mxu0 %v1060
    %1169 = vmatprep.subr.mxu0 0.0
    %1170 = vmatpush2.msra.mxu0 %v1059
    %1171 = vmatprep.mubr.f32.mxu0 %v1033
    %1172 = vmatmul.mubr.f32.gmra.mxu0 %v1016
    %v1173 = vpop.f32.mrf.mxu0
    %v1174 = vadd.f32 0.0, %v1173
    %v1175 = vpop.f32.mrf.mxu0
    %1176 = vdwg.mxu0
    %1177 = vmatprep.subr.mxu0 0.0
    %1178 = vmatpush1.msra.mxu0 %v1090
    %1179 = vmatprep.subr.mxu0 0.0
    %1180 = vmatpush1.msra.mxu0 %v1089
    %1181 = vmatprep.subr.mxu0 0.0
    %1182 = vmatpush1.msra.mxu0 %v1088
    %1183 = vmatprep.subr.mxu0 0.0
    %1184 = vmatpush1.msra.mxu0 %v1087
    %1185 = vmatprep.subr.mxu0 0.0
    %1186 = vmatpush1.msra.mxu0 %v1086
    %1187 = vmatprep.subr.mxu0 0.0
    %1188 = vmatpush1.msra.mxu0 %v1085
    %1189 = vmatprep.subr.mxu0 0.0
    %1190 = vmatpush1.msra.mxu0 %v1084
    %1191 = vmatprep.subr.mxu0 0.0
    %1192 = vmatpush1.msra.mxu0 %v1083
    %1193 = vmatprep.subr.mxu0 0.0
    %1194 = vmatpush1.msra.mxu0 %v1082
    %1195 = vmatprep.subr.mxu0 0.0
    %1196 = vmatpush1.msra.mxu0 %v1081
    %1197 = vmatprep.subr.mxu0 0.0
    %1198 = vmatpush1.msra.mxu0 %v1080
    %1199 = vmatprep.subr.mxu0 0.0
    %1200 = vmatpush1.msra.mxu0 %v1079
    %1201 = vmatprep.subr.mxu0 0.0
    %1202 = vmatpush1.msra.mxu0 %v1078
    %1203 = vmatprep.subr.mxu0 0.0
    %1204 = vmatpush1.msra.mxu0 %v1077
    %1205 = vmatprep.subr.mxu0 0.0
    %1206 = vmatpush1.msra.mxu0 %v1076
    %1207 = vmatprep.subr.mxu0 0.0
    %1208 = vmatpush1.msra.mxu0 %v1075
    %1209 = vmatprep.subr.mxu0 0.0
    %1210 = vmatpush2.msra.mxu0 %v1106
    %1211 = vmatprep.subr.mxu0 0.0
    %1212 = vmatpush2.msra.mxu0 %v1105
    %1213 = vmatprep.subr.mxu0 0.0
    %1214 = vmatpush2.msra.mxu0 %v1104
    %1215 = vmatprep.subr.mxu0 0.0
    %1216 = vmatpush2.msra.mxu0 %v1103
    %1217 = vmatprep.subr.mxu0 0.0
    %1218 = vmatpush2.msra.mxu0 %v1102
    %1219 = vmatprep.subr.mxu0 0.0
    %1220 = vmatpush2.msra.mxu0 %v1101
    %1221 = vmatprep.subr.mxu0 0.0
    %1222 = vmatpush2.msra.mxu0 %v1100
    %1223 = vmatprep.subr.mxu0 0.0
    %1224 = vmatpush2.msra.mxu0 %v1099
    %1225 = vmatprep.subr.mxu0 0.0
    %1226 = vmatpush2.msra.mxu0 %v1098
    %1227 = vmatprep.subr.mxu0 0.0
    %1228 = vmatpush2.msra.mxu0 %v1097
    %1229 = vmatprep.subr.mxu0 0.0
    %1230 = vmatpush2.msra.mxu0 %v1096
    %1231 = vmatprep.subr.mxu0 0.0
    %1232 = vmatpush2.msra.mxu0 %v1095
    %1233 = vmatprep.subr.mxu0 0.0
    %1234 = vmatpush2.msra.mxu0 %v1094
    %1235 = vmatprep.subr.mxu0 0.0
    %1236 = vmatpush2.msra.mxu0 %v1093
    %1237 = vmatprep.subr.mxu0 0.0
    %1238 = vmatpush2.msra.mxu0 %v1092
    %1239 = vmatprep.subr.mxu0 0.0
    %1240 = vmatpush2.msra.mxu0 %v1091
    %1241 = vmatprep.mubr.f32.mxu0 %v1041
    %1242 = vmatmul.mubr.f32.gmra.mxu0 %v1037
    %v1243 = vpop.f32.mrf.mxu0
    %v1244 = vadd.f32 %v1174, %v1243
    %v1245 = vpop.f32.mrf.mxu0
    %1246 = vdwg.mxu0
    %v1247 = vrot.slane %v1244, 4
    %v1248 = vadd.f32 %v1244, %v1247
    %v1249 = vrot.slane %v1248, 2
    %v1250 = vadd.f32 %v1248, %v1249
    %v1251 = vrot.slane %v1250, 1
    %v1252 = vadd.f32 %v1250, %v1251
    %v1253 = vrcp.pop 8.0
    %v1254 = vmul.f32 %v1252, %v1253
    %v1255 = vmul.f32 %v1244, %v1244
    %v1256 = vrot.slane %v1255, 4
    %v1257 = vadd.f32 %v1255, %v1256
    %v1258 = vrot.slane %v1257, 2
    %v1259 = vadd.f32 %v1257, %v1258
    %v1260 = vrot.slane %v1259, 1
    %v1261 = vadd.f32 %v1259, %v1260
    %v1262 = vmul.f32 %v1261, %v1253
    %v1263 = vsel %vm793, %v1254, %v1262
    %v1264 = vld [vmem:[#allocation3] sm:$0xff]
    %v1265 = vld [vmem:[#allocation3 + $0x8] sm:$0xff]
    %v1266 = vld [vmem:[#allocation3 + $0x10] sm:$0xff]
    %v1267 = vld [vmem:[#allocation3 + $0x18] sm:$0xff]
    %v1268 = vld [vmem:[#allocation3 + $0x20] sm:$0xff]
    %v1269 = vld [vmem:[#allocation3 + $0x28] sm:$0xff]
    %v1270 = vld [vmem:[#allocation3 + $0x30] sm:$0xff]
    %v1271 = vld [vmem:[#allocation3 + $0x38] sm:$0xff]
    %v1272 = vld [vmem:[#allocation3 + $0x40] sm:$0xff]
    %v1273 = vld [vmem:[#allocation3 + $0x48] sm:$0xff]
    %v1274 = vld [vmem:[#allocation3 + $0x50] sm:$0xff]
    %v1275 = vld [vmem:[#allocation3 + $0x58] sm:$0xff]
    %v1276 = vld [vmem:[#allocation3 + $0x60] sm:$0xff]
    %v1277 = vld [vmem:[#allocation3 + $0x68] sm:$0xff]
    %v1278 = vld [vmem:[#allocation3 + $0x70] sm:$0xff]
    %v1279 = vld [vmem:[#allocation3 + $0x78] sm:$0xff]
    %1280 = vmatprep.subr.mxu0 0.0
    %1281 = vmatpush1.msra.mxu0 %v1279
    %1282 = vmatprep.subr.mxu0 0.0
    %1283 = vmatpush1.msra.mxu0 %v1278
    %1284 = vmatprep.subr.mxu0 0.0
    %1285 = vmatpush1.msra.mxu0 %v1277
    %1286 = vmatprep.subr.mxu0 0.0
    %1287 = vmatpush1.msra.mxu0 %v1276
    %1288 = vmatprep.subr.mxu0 0.0
    %1289 = vmatpush1.msra.mxu0 %v1275
    %1290 = vmatprep.subr.mxu0 0.0
    %1291 = vmatpush1.msra.mxu0 %v1274
    %1292 = vmatprep.subr.mxu0 0.0
    %1293 = vmatpush1.msra.mxu0 %v1273
    %1294 = vmatprep.subr.mxu0 0.0
    %1295 = vmatpush1.msra.mxu0 %v1272
    %1296 = vmatprep.subr.mxu0 0.0
    %1297 = vmatpush1.msra.mxu0 %v1271
    %1298 = vmatprep.subr.mxu0 0.0
    %1299 = vmatpush1.msra.mxu0 %v1270
    %1300 = vmatprep.subr.mxu0 0.0
    %1301 = vmatpush1.msra.mxu0 %v1269
    %1302 = vmatprep.subr.mxu0 0.0
    %1303 = vmatpush1.msra.mxu0 %v1268
    %1304 = vmatprep.subr.mxu0 0.0
    %1305 = vmatpush1.msra.mxu0 %v1267
    %1306 = vmatprep.subr.mxu0 0.0
    %1307 = vmatpush1.msra.mxu0 %v1266
    %1308 = vmatprep.subr.mxu0 0.0
    %1309 = vmatpush1.msra.mxu0 %v1265
    %1310 = vmatprep.subr.mxu0 0.0
    %1311 = vmatpush1.msra.mxu0 %v1264
    %1312 = vmatprep.subr.mxu0 0.0
    %1313 = vmatpush2.msra.mxu0 0.0
    %1314 = vmatprep.subr.mxu0 0.0
    %1315 = vmatpush2.msra.mxu0 0.0
    %1316 = vmatprep.subr.mxu0 0.0
    %1317 = vmatpush2.msra.mxu0 0.0
    %1318 = vmatprep.subr.mxu0 0.0
    %1319 = vmatpush2.msra.mxu0 0.0
    %1320 = vmatprep.subr.mxu0 0.0
    %1321 = vmatpush2.msra.mxu0 0.0
    %1322 = vmatprep.subr.mxu0 0.0
    %1323 = vmatpush2.msra.mxu0 0.0
    %1324 = vmatprep.subr.mxu0 0.0
    %1325 = vmatpush2.msra.mxu0 0.0
    %1326 = vmatprep.subr.mxu0 0.0
    %1327 = vmatpush2.msra.mxu0 0.0
    %1328 = vmatprep.subr.mxu0 0.0
    %1329 = vmatpush2.msra.mxu0 0.0
    %1330 = vmatprep.subr.mxu0 0.0
    %1331 = vmatpush2.msra.mxu0 0.0
    %1332 = vmatprep.subr.mxu0 0.0
    %1333 = vmatpush2.msra.mxu0 0.0
    %1334 = vmatprep.subr.mxu0 0.0
    %1335 = vmatpush2.msra.mxu0 0.0
    %1336 = vmatprep.subr.mxu0 0.0
    %1337 = vmatpush2.msra.mxu0 0.0
    %1338 = vmatprep.subr.mxu0 0.0
    %1339 = vmatpush2.msra.mxu0 0.0
    %1340 = vmatprep.subr.mxu0 0.0
    %1341 = vmatpush2.msra.mxu0 0.0
    %1342 = vmatprep.subr.mxu0 0.0
    %1343 = vmatpush2.msra.mxu0 0.0
    %1344 = vmatprep.mubr.f32.mxu0 0.0
    %1345 = vmatmul.mubr.f32.gmra.mxu0 %v1263
    %v1346 = vpop.f32.mrf.mxu0
    %v1347 = vadd.f32 0.0, %v1346
    %v1348 = vpop.f32.mrf.mxu0
    %1349 = vdwg.mxu0
    %v1350 = vmul.f32 %v1347, %v1347
    %v1352 = vrot.slane %v1350, 7
    %v1354 = vsub.f32 %v1347, %v1352
    %v1355 = vld [vmem:[%s10] sm:$0x1]
    %v1356 = vadd.f32 %v1354, 1e-05
    %v1357 = vrsqrt.pop %v1356
    %v1360 = vunpack.c.l.s4 1966171168
    %v1361 = vunpack.c.0.s8 %v1360
    %v1362 = vlaneseq
    %v1363 = vshrl.u32 %v1362, 7
    %v1364 = vsub.s32 %v1361, %v1363
    %v1365 = vrot.slane %v1357, %v1364
    %v1366 = vcombine.high %v1365, %v1365
    %v1368 = vunpack.c.l.s4 1966171168
    %v1369 = vunpack.c.0.s8 %v1368
    %v1370 = vlaneseq
    %v1371 = vshrl.u32 %v1370, 7
    %v1372 = vsub.s32 %v1369, %v1371
    %v1373 = vrot.slane %v1366, %v1372
    %v1375 = vmul.f32 %v1355, %v1373
    %v1376 = vlaneseq
    %v1377 = vshrl.u32 %v1376, 7
    %v1378 = vsub.s32 0, %v1377
    %v1379 = vrot.slane %v1347, %v1378
    %v1380 = vsub.f32 %v1244, %v1379
    %v1382 = vlaneseq
    %v1383 = vshrl.u32 %v1382, 7
    %v1384 = vsub.s32 0, %v1383
    %v1385 = vrot.slane %v1375, %v1384
    %v1387 = vmul.f32 %v1380, %v1385
    %v1388 = vld [vmem:[%s11] sm:$0x1]
    %v1390 = vlaneseq
    %v1391 = vshrl.u32 %v1390, 7
    %v1392 = vsub.s32 0, %v1391
    %v1393 = vrot.slane %v1388, %v1392
    %v1395 = vadd.f32 %v1387, %v1393
    %vm1396 = vcmp.ge.f32.partialorder %v1395, 0.0
    %v1397 = vmul.f32 %v1395, 0.2
    %v1398 = vsel %vm1396, %v1395, %v1397
    %v1399 = vld [vmem:[#allocation5] sm:$0xff]
    %v1400 = vld [vmem:[#allocation5 + $0x8] sm:$0xf]
    %vm1401 = vcmask 64512
    %v1403 = vsel %vm1401, %v1399, 0
    %v1406 = vsel %vm1401, %v1400, 0
    %1408 = vmatprep.subr.mxu0 0.0
    %1409 = vmatpush1.msra.mxu0 0.0
    %1410 = vmatprep.subr.mxu0 0.0
    %1411 = vmatpush1.msra.mxu0 0.0
    %1412 = vmatprep.subr.mxu0 0.0
    %1413 = vmatpush1.msra.mxu0 0.0
    %1414 = vmatprep.subr.mxu0 0.0
    %1415 = vmatpush1.msra.mxu0 0.0
    %1416 = vmatprep.subr.mxu0 0.0
    %1417 = vmatpush1.msra.mxu0 0.0
    %1418 = vmatprep.subr.mxu0 0.0
    %1419 = vmatpush1.msra.mxu0 0.0
    %1420 = vmatprep.subr.mxu0 0.0
    %1421 = vmatpush1.msra.mxu0 0.0
    %1422 = vmatprep.subr.mxu0 0.0
    %1423 = vmatpush1.msra.mxu0 0.0
    %1424 = vmatprep.subr.mxu0 0.0
    %1425 = vmatpush1.msra.mxu0 0.0
    %1426 = vmatprep.subr.mxu0 0.0
    %1427 = vmatpush1.msra.mxu0 0.0
    %1428 = vmatprep.subr.mxu0 0.0
    %1429 = vmatpush1.msra.mxu0 0.0
    %1430 = vmatprep.subr.mxu0 0.0
    %1431 = vmatpush1.msra.mxu0 0.0
    %1432 = vmatprep.subr.mxu0 0.0
    %1433 = vmatpush1.msra.mxu0 0.0
    %1434 = vmatprep.subr.mxu0 0.0
    %1435 = vmatpush1.msra.mxu0 0.0
    %1436 = vmatprep.subr.mxu0 0.0
    %1437 = vmatpush1.msra.mxu0 0.0
    %1438 = vmatprep.subr.mxu0 0.0
    %1439 = vmatpush1.msra.mxu0 %v1398
    %1440 = vmatprep.subr.mxu0 0.0
    %1441 = vmatpush2.msra.mxu0 0.0
    %1442 = vmatprep.subr.mxu0 0.0
    %1443 = vmatpush2.msra.mxu0 0.0
    %1444 = vmatprep.subr.mxu0 0.0
    %1445 = vmatpush2.msra.mxu0 0.0
    %1446 = vmatprep.subr.mxu0 0.0
    %1447 = vmatpush2.msra.mxu0 0.0
    %1448 = vmatprep.subr.mxu0 0.0
    %1449 = vmatpush2.msra.mxu0 0.0
    %1450 = vmatprep.subr.mxu0 0.0
    %1451 = vmatpush2.msra.mxu0 0.0
    %1452 = vmatprep.subr.mxu0 0.0
    %1453 = vmatpush2.msra.mxu0 0.0
    %1454 = vmatprep.subr.mxu0 0.0
    %1455 = vmatpush2.msra.mxu0 0.0
    %1456 = vmatprep.subr.mxu0 0.0
    %1457 = vmatpush2.msra.mxu0 0.0
    %1458 = vmatprep.subr.mxu0 0.0
    %1459 = vmatpush2.msra.mxu0 0.0
    %1460 = vmatprep.subr.mxu0 0.0
    %1461 = vmatpush2.msra.mxu0 0.0
    %1462 = vmatprep.subr.mxu0 0.0
    %1463 = vmatpush2.msra.mxu0 0.0
    %1464 = vmatprep.subr.mxu0 0.0
    %1465 = vmatpush2.msra.mxu0 0.0
    %1466 = vmatprep.subr.mxu0 0.0
    %1467 = vmatpush2.msra.mxu0 0.0
    %1468 = vmatprep.subr.mxu0 0.0
    %1469 = vmatpush2.msra.mxu0 0.0
    %1470 = vmatprep.subr.mxu0 0.0
    %1471 = vmatpush2.msra.mxu0 0.0
    %1472 = vmatprep.mubr.f32.mxu0 0.0
    %1473 = vmatmul.mubr.f32.gmra.mxu0 %v1403
    %v1474 = vpop.f32.mrf.mxu0
    %v1475 = vadd.f32 0.0, %v1474
    %v1476 = vpop.f32.mrf.mxu0
    %1477 = vmatprep.mubr.f32.mxu0 0.0
    %1478 = vmatmul.mubr.f32.gmra.mxu0 %v1406
    %v1479 = vpop.f32.mrf.mxu0
    %v1480 = vadd.f32 0.0, %v1479
    %v1481 = vpop.f32.mrf.mxu0
    %1482 = vdwg.mxu0
    %vm1485 = vcmask 1041408
    %v1486 = vrot.slane %v1475, 6
    %v1487 = vrot.slane %v1480, 6
    %v1488 = vsel %vm1485, %v1486, %v1487
    %v1490 = vrot.slane %v1475, 2
    %v1492 = vld [vmem:[%s14] sm:$0xff]
    %v1493 = vld [vmem:[%s14 + $0x8] sm:$0xff]
    %v1494 = vld [vmem:[%s14 + $0x10] sm:$0xff]
    %v1495 = vld [vmem:[%s14 + $0x18] sm:$0xff]
    %v1496 = vld [vmem:[%s14 + $0x20] sm:$0xff]
    %v1497 = vld [vmem:[%s14 + $0x28] sm:$0xff]
    %v1498 = vld [vmem:[%s14 + $0x30] sm:$0xff]
    %v1499 = vld [vmem:[%s14 + $0x38] sm:$0xff]
    %v1500 = vld [vmem:[%s14 + $0x40] sm:$0xff]
    %v1501 = vld [vmem:[%s14 + $0x48] sm:$0xff]
    %v1502 = vld [vmem:[%s14 + $0x50] sm:$0xff]
    %v1503 = vld [vmem:[%s14 + $0x58] sm:$0xff]
    %v1504 = vld [vmem:[%s14 + $0x60] sm:$0xff]
    %v1505 = vld [vmem:[%s14 + $0x68] sm:$0xff]
    %v1506 = vld [vmem:[%s14 + $0x70] sm:$0xff]
    %v1507 = vld [vmem:[%s14 + $0x78] sm:$0xff]
    %v1508 = vld [vmem:[%s14 + $0x80] sm:$0xff]
    %v1509 = vld [vmem:[%s14 + $0x88] sm:$0xff]
    %v1510 = vld [vmem:[%s14 + $0x90] sm:$0xff]
    %v1511 = vld [vmem:[%s14 + $0x98] sm:$0xff]
    %v1512 = vld [vmem:[%s14 + $0xa0] sm:$0xff]
    %v1513 = vld [vmem:[%s14 + $0xa8] sm:$0xff]
    %v1514 = vld [vmem:[%s14 + $0xb0] sm:$0xff]
    %v1515 = vld [vmem:[%s14 + $0xb8] sm:$0xff]
    %v1516 = vld [vmem:[%s14 + $0xc0] sm:$0xff]
    %v1517 = vld [vmem:[%s14 + $0xc8] sm:$0xff]
    %v1518 = vld [vmem:[%s14 + $0xd0] sm:$0xff]
    %v1519 = vld [vmem:[%s14 + $0xd8] sm:$0xff]
    %v1520 = vld [vmem:[%s14 + $0xe0] sm:$0xff]
    %v1521 = vld [vmem:[%s14 + $0xe8] sm:$0xff]
    %v1522 = vld [vmem:[%s14 + $0xf0] sm:$0xff]
    %v1523 = vld [vmem:[%s14 + $0xf8] sm:$0xff]
    %v1524 = vld [vmem:[%s14 + $0x100] sm:$0xff]
    %v1525 = vld [vmem:[%s14 + $0x108] sm:$0xff]
    %v1526 = vld [vmem:[%s14 + $0x110] sm:$0xff]
    %v1527 = vld [vmem:[%s14 + $0x118] sm:$0xff]
    %v1528 = vld [vmem:[%s14 + $0x120] sm:$0xff]
    %v1529 = vld [vmem:[%s14 + $0x128] sm:$0xff]
    %v1530 = vld [vmem:[%s14 + $0x130] sm:$0xff]
    %v1531 = vld [vmem:[%s14 + $0x138] sm:$0xff]
    %v1532 = vld [vmem:[%s14 + $0x140] sm:$0xff]
    %v1533 = vld [vmem:[%s14 + $0x148] sm:$0xff]
    %v1534 = vld [vmem:[%s14 + $0x150] sm:$0xff]
    %v1535 = vld [vmem:[%s14 + $0x158] sm:$0xff]
    %v1536 = vld [vmem:[%s14 + $0x160] sm:$0xff]
    %v1537 = vld [vmem:[%s14 + $0x168] sm:$0xff]
    %v1538 = vld [vmem:[%s14 + $0x170] sm:$0xff]
    %v1539 = vld [vmem:[%s14 + $0x178] sm:$0xff]
    %v1540 = vld [vmem:[%s14 + $0x180] sm:$0xff]
    %v1541 = vld [vmem:[%s14 + $0x188] sm:$0xff]
    %v1542 = vld [vmem:[%s14 + $0x190] sm:$0xff]
    %v1543 = vld [vmem:[%s14 + $0x198] sm:$0xff]
    %v1544 = vld [vmem:[%s14 + $0x1a0] sm:$0xff]
    %v1545 = vld [vmem:[%s14 + $0x1a8] sm:$0xff]
    %v1546 = vld [vmem:[%s14 + $0x1b0] sm:$0xff]
    %v1547 = vld [vmem:[%s14 + $0x1b8] sm:$0xff]
    %v1548 = vld [vmem:[%s14 + $0x1c0] sm:$0xff]
    %v1549 = vld [vmem:[%s14 + $0x1c8] sm:$0xff]
    %v1550 = vld [vmem:[%s14 + $0x1d0] sm:$0xff]
    %v1551 = vld [vmem:[%s14 + $0x1d8] sm:$0xff]
    %v1552 = vld [vmem:[%s14 + $0x1e0] sm:$0xff]
    %v1553 = vld [vmem:[%s14 + $0x1e8] sm:$0xff]
    %v1554 = vld [vmem:[%s14 + $0x1f0] sm:$0xff]
    %v1555 = vld [vmem:[%s14 + $0x1f8] sm:$0xff]
    %1556 = vmatprep.subr.mxu0 0.0
    %1557 = vmatpush1.msra.mxu0 %v1507
    %1558 = vmatprep.subr.mxu0 0.0
    %1559 = vmatpush1.msra.mxu0 %v1506
    %1560 = vmatprep.subr.mxu0 0.0
    %1561 = vmatpush1.msra.mxu0 %v1505
    %1562 = vmatprep.subr.mxu0 0.0
    %1563 = vmatpush1.msra.mxu0 %v1504
    %1564 = vmatprep.subr.mxu0 0.0
    %1565 = vmatpush1.msra.mxu0 %v1503
    %1566 = vmatprep.subr.mxu0 0.0
    %1567 = vmatpush1.msra.mxu0 %v1502
    %1568 = vmatprep.subr.mxu0 0.0
    %1569 = vmatpush1.msra.mxu0 %v1501
    %1570 = vmatprep.subr.mxu0 0.0
    %1571 = vmatpush1.msra.mxu0 %v1500
    %1572 = vmatprep.subr.mxu0 0.0
    %1573 = vmatpush1.msra.mxu0 %v1499
    %1574 = vmatprep.subr.mxu0 0.0
    %1575 = vmatpush1.msra.mxu0 %v1498
    %1576 = vmatprep.subr.mxu0 0.0
    %1577 = vmatpush1.msra.mxu0 %v1497
    %1578 = vmatprep.subr.mxu0 0.0
    %1579 = vmatpush1.msra.mxu0 %v1496
    %1580 = vmatprep.subr.mxu0 0.0
    %1581 = vmatpush1.msra.mxu0 %v1495
    %1582 = vmatprep.subr.mxu0 0.0
    %1583 = vmatpush1.msra.mxu0 %v1494
    %1584 = vmatprep.subr.mxu0 0.0
    %1585 = vmatpush1.msra.mxu0 %v1493
    %1586 = vmatprep.subr.mxu0 0.0
    %1587 = vmatpush1.msra.mxu0 %v1492
    %1588 = vmatprep.subr.mxu0 0.0
    %1589 = vmatpush2.msra.mxu0 %v1523
    %1590 = vmatprep.subr.mxu0 0.0
    %1591 = vmatpush2.msra.mxu0 %v1522
    %1592 = vmatprep.subr.mxu0 0.0
    %1593 = vmatpush2.msra.mxu0 %v1521
    %1594 = vmatprep.subr.mxu0 0.0
    %1595 = vmatpush2.msra.mxu0 %v1520
    %1596 = vmatprep.subr.mxu0 0.0
    %1597 = vmatpush2.msra.mxu0 %v1519
    %1598 = vmatprep.subr.mxu0 0.0
    %1599 = vmatpush2.msra.mxu0 %v1518
    %1600 = vmatprep.subr.mxu0 0.0
    %1601 = vmatpush2.msra.mxu0 %v1517
    %1602 = vmatprep.subr.mxu0 0.0
    %1603 = vmatpush2.msra.mxu0 %v1516
    %1604 = vmatprep.subr.mxu0 0.0
    %1605 = vmatpush2.msra.mxu0 %v1515
    %1606 = vmatprep.subr.mxu0 0.0
    %1607 = vmatpush2.msra.mxu0 %v1514
    %1608 = vmatprep.subr.mxu0 0.0
    %1609 = vmatpush2.msra.mxu0 %v1513
    %1610 = vmatprep.subr.mxu0 0.0
    %1611 = vmatpush2.msra.mxu0 %v1512
    %1612 = vmatprep.subr.mxu0 0.0
    %1613 = vmatpush2.msra.mxu0 %v1511
    %1614 = vmatprep.subr.mxu0 0.0
    %1615 = vmatpush2.msra.mxu0 %v1510
    %1616 = vmatprep.subr.mxu0 0.0
    %1617 = vmatpush2.msra.mxu0 %v1509
    %1618 = vmatprep.subr.mxu0 0.0
    %1619 = vmatpush2.msra.mxu0 %v1508
    %1620 = vmatprep.mubr.f32.mxu0 %v1488
    %1621 = vmatmul.mubr.f32.gmra.mxu0 %v1475
    %v1622 = vpop.f32.mrf.mxu0
    %v1623 = vadd.f32 0.0, %v1622
    %v1624 = vpop.f32.mrf.mxu0
    %1625 = vdwg.mxu0
    %1626 = vmatprep.subr.mxu0 0.0
    %1627 = vmatpush1.msra.mxu0 %v1539
    %1628 = vmatprep.subr.mxu0 0.0
    %1629 = vmatpush1.msra.mxu0 %v1538
    %1630 = vmatprep.subr.mxu0 0.0
    %1631 = vmatpush1.msra.mxu0 %v1537
    %1632 = vmatprep.subr.mxu0 0.0
    %1633 = vmatpush1.msra.mxu0 %v1536
    %1634 = vmatprep.subr.mxu0 0.0
    %1635 = vmatpush1.msra.mxu0 %v1535
    %1636 = vmatprep.subr.mxu0 0.0
    %1637 = vmatpush1.msra.mxu0 %v1534
    %1638 = vmatprep.subr.mxu0 0.0
    %1639 = vmatpush1.msra.mxu0 %v1533
    %1640 = vmatprep.subr.mxu0 0.0
    %1641 = vmatpush1.msra.mxu0 %v1532
    %1642 = vmatprep.subr.mxu0 0.0
    %1643 = vmatpush1.msra.mxu0 %v1531
    %1644 = vmatprep.subr.mxu0 0.0
    %1645 = vmatpush1.msra.mxu0 %v1530
    %1646 = vmatprep.subr.mxu0 0.0
    %1647 = vmatpush1.msra.mxu0 %v1529
    %1648 = vmatprep.subr.mxu0 0.0
    %1649 = vmatpush1.msra.mxu0 %v1528
    %1650 = vmatprep.subr.mxu0 0.0
    %1651 = vmatpush1.msra.mxu0 %v1527
    %1652 = vmatprep.subr.mxu0 0.0
    %1653 = vmatpush1.msra.mxu0 %v1526
    %1654 = vmatprep.subr.mxu0 0.0
    %1655 = vmatpush1.msra.mxu0 %v1525
    %1656 = vmatprep.subr.mxu0 0.0
    %1657 = vmatpush1.msra.mxu0 %v1524
    %1658 = vmatprep.subr.mxu0 0.0
    %1659 = vmatpush2.msra.mxu0 %v1555
    %1660 = vmatprep.subr.mxu0 0.0
    %1661 = vmatpush2.msra.mxu0 %v1554
    %1662 = vmatprep.subr.mxu0 0.0
    %1663 = vmatpush2.msra.mxu0 %v1553
    %1664 = vmatprep.subr.mxu0 0.0
    %1665 = vmatpush2.msra.mxu0 %v1552
    %1666 = vmatprep.subr.mxu0 0.0
    %1667 = vmatpush2.msra.mxu0 %v1551
    %1668 = vmatprep.subr.mxu0 0.0
    %1669 = vmatpush2.msra.mxu0 %v1550
    %1670 = vmatprep.subr.mxu0 0.0
    %1671 = vmatpush2.msra.mxu0 %v1549
    %1672 = vmatprep.subr.mxu0 0.0
    %1673 = vmatpush2.msra.mxu0 %v1548
    %1674 = vmatprep.subr.mxu0 0.0
    %1675 = vmatpush2.msra.mxu0 %v1547
    %1676 = vmatprep.subr.mxu0 0.0
    %1677 = vmatpush2.msra.mxu0 %v1546
    %1678 = vmatprep.subr.mxu0 0.0
    %1679 = vmatpush2.msra.mxu0 %v1545
    %1680 = vmatprep.subr.mxu0 0.0
    %1681 = vmatpush2.msra.mxu0 %v1544
    %1682 = vmatprep.subr.mxu0 0.0
    %1683 = vmatpush2.msra.mxu0 %v1543
    %1684 = vmatprep.subr.mxu0 0.0
    %1685 = vmatpush2.msra.mxu0 %v1542
    %1686 = vmatprep.subr.mxu0 0.0
    %1687 = vmatpush2.msra.mxu0 %v1541
    %1688 = vmatprep.subr.mxu0 0.0
    %1689 = vmatpush2.msra.mxu0 %v1540
    %1690 = vmatprep.mubr.f32.mxu0 %v1480
    %1691 = vmatmul.mubr.f32.gmra.mxu0 %v1490
    %v1692 = vpop.f32.mrf.mxu0
    %v1693 = vadd.f32 %v1623, %v1692
    %v1694 = vpop.f32.mrf.mxu0
    %1695 = vdwg.mxu0
    %v1696 = vsel %vm552, %v1693, 0.0
    %v1697 = vrot.slane %v1696, 4
    %v1698 = vadd.f32 %v1696, %v1697
    %v1699 = vrot.slane %v1698, 2
    %v1700 = vadd.f32 %v1698, %v1699
    %v1701 = vrot.slane %v1700, 1
    %v1702 = vadd.f32 %v1700, %v1701
    %v1703 = vrcp.pop 4.0
    %v1704 = vmul.f32 %v1702, %v1703
    %v1705 = vmul.f32 %v1693, %v1693
    %v1706 = vsel %vm552, %v1705, 0.0
    %v1707 = vrot.slane %v1706, 4
    %v1708 = vadd.f32 %v1706, %v1707
    %v1709 = vrot.slane %v1708, 2
    %v1710 = vadd.f32 %v1708, %v1709
    %v1711 = vrot.slane %v1710, 1
    %v1712 = vadd.f32 %v1710, %v1711
    %v1713 = vmul.f32 %v1712, %v1703
    %v1714 = vsel %vm793, %v1704, %v1713
    %v1715 = vld [vmem:[#allocation7] sm:$0xff]
    %v1716 = vld [vmem:[#allocation7 + $0x8] sm:$0xff]
    %v1717 = vld [vmem:[#allocation7 + $0x10] sm:$0xff]
    %v1718 = vld [vmem:[#allocation7 + $0x18] sm:$0xff]
    %v1719 = vld [vmem:[#allocation7 + $0x20] sm:$0xff]
    %v1720 = vld [vmem:[#allocation7 + $0x28] sm:$0xff]
    %v1721 = vld [vmem:[#allocation7 + $0x30] sm:$0xff]
    %v1722 = vld [vmem:[#allocation7 + $0x38] sm:$0xff]
    %v1723 = vld [vmem:[#allocation7 + $0x40] sm:$0xff]
    %v1724 = vld [vmem:[#allocation7 + $0x48] sm:$0xff]
    %v1725 = vld [vmem:[#allocation7 + $0x50] sm:$0xff]
    %v1726 = vld [vmem:[#allocation7 + $0x58] sm:$0xff]
    %v1727 = vld [vmem:[#allocation7 + $0x60] sm:$0xff]
    %v1728 = vld [vmem:[#allocation7 + $0x68] sm:$0xff]
    %v1729 = vld [vmem:[#allocation7 + $0x70] sm:$0xff]
    %v1730 = vld [vmem:[#allocation7 + $0x78] sm:$0xff]
    %1731 = vmatprep.subr.mxu0 0.0
    %1732 = vmatpush1.msra.mxu0 %v1730
    %1733 = vmatprep.subr.mxu0 0.0
    %1734 = vmatpush1.msra.mxu0 %v1729
    %1735 = vmatprep.subr.mxu0 0.0
    %1736 = vmatpush1.msra.mxu0 %v1728
    %1737 = vmatprep.subr.mxu0 0.0
    %1738 = vmatpush1.msra.mxu0 %v1727
    %1739 = vmatprep.subr.mxu0 0.0
    %1740 = vmatpush1.msra.mxu0 %v1726
    %1741 = vmatprep.subr.mxu0 0.0
    %1742 = vmatpush1.msra.mxu0 %v1725
    %1743 = vmatprep.subr.mxu0 0.0
    %1744 = vmatpush1.msra.mxu0 %v1724
    %1745 = vmatprep.subr.mxu0 0.0
    %1746 = vmatpush1.msra.mxu0 %v1723
    %1747 = vmatprep.subr.mxu0 0.0
    %1748 = vmatpush1.msra.mxu0 %v1722
    %1749 = vmatprep.subr.mxu0 0.0
    %1750 = vmatpush1.msra.mxu0 %v1721
    %1751 = vmatprep.subr.mxu0 0.0
    %1752 = vmatpush1.msra.mxu0 %v1720
    %1753 = vmatprep.subr.mxu0 0.0
    %1754 = vmatpush1.msra.mxu0 %v1719
    %1755 = vmatprep.subr.mxu0 0.0
    %1756 = vmatpush1.msra.mxu0 %v1718
    %1757 = vmatprep.subr.mxu0 0.0
    %1758 = vmatpush1.msra.mxu0 %v1717
    %1759 = vmatprep.subr.mxu0 0.0
    %1760 = vmatpush1.msra.mxu0 %v1716
    %1761 = vmatprep.subr.mxu0 0.0
    %1762 = vmatpush1.msra.mxu0 %v1715
    %1763 = vmatprep.subr.mxu0 0.0
    %1764 = vmatpush2.msra.mxu0 0.0
    %1765 = vmatprep.subr.mxu0 0.0
    %1766 = vmatpush2.msra.mxu0 0.0
    %1767 = vmatprep.subr.mxu0 0.0
    %1768 = vmatpush2.msra.mxu0 0.0
    %1769 = vmatprep.subr.mxu0 0.0
    %1770 = vmatpush2.msra.mxu0 0.0
    %1771 = vmatprep.subr.mxu0 0.0
    %1772 = vmatpush2.msra.mxu0 0.0
    %1773 = vmatprep.subr.mxu0 0.0
    %1774 = vmatpush2.msra.mxu0 0.0
    %1775 = vmatprep.subr.mxu0 0.0
    %1776 = vmatpush2.msra.mxu0 0.0
    %1777 = vmatprep.subr.mxu0 0.0
    %1778 = vmatpush2.msra.mxu0 0.0
    %1779 = vmatprep.subr.mxu0 0.0
    %1780 = vmatpush2.msra.mxu0 0.0
    %1781 = vmatprep.subr.mxu0 0.0
    %1782 = vmatpush2.msra.mxu0 0.0
    %1783 = vmatprep.subr.mxu0 0.0
    %1784 = vmatpush2.msra.mxu0 0.0
    %1785 = vmatprep.subr.mxu0 0.0
    %1786 = vmatpush2.msra.mxu0 0.0
    %1787 = vmatprep.subr.mxu0 0.0
    %1788 = vmatpush2.msra.mxu0 0.0
    %1789 = vmatprep.subr.mxu0 0.0
    %1790 = vmatpush2.msra.mxu0 0.0
    %1791 = vmatprep.subr.mxu0 0.0
    %1792 = vmatpush2.msra.mxu0 0.0
    %1793 = vmatprep.subr.mxu0 0.0
    %1794 = vmatpush2.msra.mxu0 0.0
    %1795 = vmatprep.mubr.f32.mxu0 0.0
    %1796 = vmatmul.mubr.f32.gmra.mxu0 %v1714
    %v1797 = vpop.f32.mrf.mxu0
    %v1798 = vadd.f32 0.0, %v1797
    %v1799 = vpop.f32.mrf.mxu0
    %1800 = vdwg.mxu0
    %v1801 = vmul.f32 %v1798, %v1798
    %v1803 = vrot.slane %v1801, 7
    %v1805 = vsub.f32 %v1798, %v1803
    %v1806 = vld [vmem:[%s15] sm:$0x1]
    %v1807 = vadd.f32 %v1805, 1e-05
    %v1808 = vrsqrt.pop %v1807
    %v1811 = vunpack.c.l.s4 1966171168
    %v1812 = vunpack.c.0.s8 %v1811
    %v1813 = vlaneseq
    %v1814 = vshrl.u32 %v1813, 7
    %v1815 = vsub.s32 %v1812, %v1814
    %v1816 = vrot.slane %v1808, %v1815
    %v1817 = vcombine.high %v1816, %v1816
    %v1819 = vunpack.c.l.s4 1966171168
    %v1820 = vunpack.c.0.s8 %v1819
    %v1821 = vlaneseq
    %v1822 = vshrl.u32 %v1821, 7
    %v1823 = vsub.s32 %v1820, %v1822
    %v1824 = vrot.slane %v1817, %v1823
    %v1826 = vmul.f32 %v1806, %v1824
    %v1827 = vlaneseq
    %v1828 = vshrl.u32 %v1827, 7
    %v1829 = vsub.s32 0, %v1828
    %v1830 = vrot.slane %v1798, %v1829
    %v1831 = vsub.f32 %v1693, %v1830
    %v1833 = vlaneseq
    %v1834 = vshrl.u32 %v1833, 7
    %v1835 = vsub.s32 0, %v1834
    %v1836 = vrot.slane %v1826, %v1835
    %v1838 = vmul.f32 %v1831, %v1836
    %v1839 = vld [vmem:[%s16] sm:$0x1]
    %v1841 = vlaneseq
    %v1842 = vshrl.u32 %v1841, 7
    %v1843 = vsub.s32 0, %v1842
    %v1844 = vrot.slane %v1839, %v1843
    %v1846 = vadd.f32 %v1838, %v1844
    %vm1847 = vcmp.ge.f32.partialorder %v1846, 0.0
    %v1848 = vmul.f32 %v1846, 0.2
    %v1849 = vsel %vm1847, %v1846, %v1848
    %v1851 = vrot.slane %v1849, 2
    %v1853 = vld [vmem:[#allocation8] sm:$0xff]
    %v1854 = vld [vmem:[#allocation8 + $0x8] sm:$0xff]
    %v1855 = vld [vmem:[#allocation8 + $0x10] sm:$0xff]
    %v1856 = vld [vmem:[#allocation8 + $0x18] sm:$0xff]
    %v1857 = vld [vmem:[#allocation8 + $0x20] sm:$0xff]
    %v1858 = vld [vmem:[#allocation8 + $0x28] sm:$0xff]
    %v1859 = vld [vmem:[#allocation8 + $0x30] sm:$0xff]
    %v1860 = vld [vmem:[#allocation8 + $0x38] sm:$0xff]
    %v1861 = vld [vmem:[#allocation8 + $0x40] sm:$0xff]
    %v1862 = vld [vmem:[#allocation8 + $0x48] sm:$0xff]
    %v1863 = vld [vmem:[#allocation8 + $0x50] sm:$0xff]
    %v1864 = vld [vmem:[#allocation8 + $0x58] sm:$0xff]
    %v1865 = vld [vmem:[#allocation8 + $0x60] sm:$0xff]
    %v1866 = vld [vmem:[#allocation8 + $0x68] sm:$0xff]
    %v1867 = vld [vmem:[#allocation8 + $0x70] sm:$0xff]
    %v1868 = vld [vmem:[#allocation8 + $0x78] sm:$0xff]
    %v1869 = vld [vmem:[#allocation8 + $0x80] sm:$0xff]
    %v1870 = vld [vmem:[#allocation8 + $0x88] sm:$0xff]
    %v1871 = vld [vmem:[#allocation8 + $0x90] sm:$0xff]
    %v1872 = vld [vmem:[#allocation8 + $0x98] sm:$0xff]
    %v1873 = vld [vmem:[#allocation8 + $0xa0] sm:$0xff]
    %v1874 = vld [vmem:[#allocation8 + $0xa8] sm:$0xff]
    %v1875 = vld [vmem:[#allocation8 + $0xb0] sm:$0xff]
    %v1876 = vld [vmem:[#allocation8 + $0xb8] sm:$0xff]
    %v1877 = vld [vmem:[#allocation8 + $0xc0] sm:$0xff]
    %v1878 = vld [vmem:[#allocation8 + $0xc8] sm:$0xff]
    %v1879 = vld [vmem:[#allocation8 + $0xd0] sm:$0xff]
    %v1880 = vld [vmem:[#allocation8 + $0xd8] sm:$0xff]
    %v1881 = vld [vmem:[#allocation8 + $0xe0] sm:$0xff]
    %v1882 = vld [vmem:[#allocation8 + $0xe8] sm:$0xff]
    %v1883 = vld [vmem:[#allocation8 + $0xf0] sm:$0xff]
    %v1884 = vld [vmem:[#allocation8 + $0xf8] sm:$0xff]
    %v1885 = vld [vmem:[#allocation2] sm:$0x1]
    %v1887 = vlaneseq
    %v1888 = vshrl.u32 %v1887, 7
    %v1889 = vsub.s32 0, %v1888
    %v1890 = vrot.slane %v1885, %v1889
    %1892 = vmatprep.subr.mxu0 0.0
    %1893 = vmatpush1.msra.mxu0 %v1868
    %1894 = vmatprep.subr.mxu0 0.0
    %1895 = vmatpush1.msra.mxu0 %v1867
    %1896 = vmatprep.subr.mxu0 0.0
    %1897 = vmatpush1.msra.mxu0 %v1866
    %1898 = vmatprep.subr.mxu0 0.0
    %1899 = vmatpush1.msra.mxu0 %v1865
    %1900 = vmatprep.subr.mxu0 0.0
    %1901 = vmatpush1.msra.mxu0 %v1864
    %1902 = vmatprep.subr.mxu0 0.0
    %1903 = vmatpush1.msra.mxu0 %v1863
    %1904 = vmatprep.subr.mxu0 0.0
    %1905 = vmatpush1.msra.mxu0 %v1862
    %1906 = vmatprep.subr.mxu0 0.0
    %1907 = vmatpush1.msra.mxu0 %v1861
    %1908 = vmatprep.subr.mxu0 0.0
    %1909 = vmatpush1.msra.mxu0 %v1860
    %1910 = vmatprep.subr.mxu0 0.0
    %1911 = vmatpush1.msra.mxu0 %v1859
    %1912 = vmatprep.subr.mxu0 0.0
    %1913 = vmatpush1.msra.mxu0 %v1858
    %1914 = vmatprep.subr.mxu0 0.0
    %1915 = vmatpush1.msra.mxu0 %v1857
    %1916 = vmatprep.subr.mxu0 0.0
    %1917 = vmatpush1.msra.mxu0 %v1856
    %1918 = vmatprep.subr.mxu0 0.0
    %1919 = vmatpush1.msra.mxu0 %v1855
    %1920 = vmatprep.subr.mxu0 0.0
    %1921 = vmatpush1.msra.mxu0 %v1854
    %1922 = vmatprep.subr.mxu0 0.0
    %1923 = vmatpush1.msra.mxu0 %v1853
    %1924 = vmatprep.subr.mxu0 0.0
    %1925 = vmatpush2.msra.mxu0 %v1884
    %1926 = vmatprep.subr.mxu0 0.0
    %1927 = vmatpush2.msra.mxu0 %v1883
    %1928 = vmatprep.subr.mxu0 0.0
    %1929 = vmatpush2.msra.mxu0 %v1882
    %1930 = vmatprep.subr.mxu0 0.0
    %1931 = vmatpush2.msra.mxu0 %v1881
    %1932 = vmatprep.subr.mxu0 0.0
    %1933 = vmatpush2.msra.mxu0 %v1880
    %1934 = vmatprep.subr.mxu0 0.0
    %1935 = vmatpush2.msra.mxu0 %v1879
    %1936 = vmatprep.subr.mxu0 0.0
    %1937 = vmatpush2.msra.mxu0 %v1878
    %1938 = vmatprep.subr.mxu0 0.0
    %1939 = vmatpush2.msra.mxu0 %v1877
    %1940 = vmatprep.subr.mxu0 0.0
    %1941 = vmatpush2.msra.mxu0 %v1876
    %1942 = vmatprep.subr.mxu0 0.0
    %1943 = vmatpush2.msra.mxu0 %v1875
    %1944 = vmatprep.subr.mxu0 0.0
    %1945 = vmatpush2.msra.mxu0 %v1874
    %1946 = vmatprep.subr.mxu0 0.0
    %1947 = vmatpush2.msra.mxu0 %v1873
    %1948 = vmatprep.subr.mxu0 0.0
    %1949 = vmatpush2.msra.mxu0 %v1872
    %1950 = vmatprep.subr.mxu0 0.0
    %1951 = vmatpush2.msra.mxu0 %v1871
    %1952 = vmatprep.subr.mxu0 0.0
    %1953 = vmatpush2.msra.mxu0 %v1870
    %1954 = vmatprep.subr.mxu0 0.0
    %1955 = vmatpush2.msra.mxu0 %v1869
    %1956 = vmatprep.mubr.f32.mxu0 %v1851
    %1957 = vmatmul.mubr.f32.gmra.mxu0 %v1849
    %v1958 = vpop.f32.mrf.mxu0
    %v1959 = vadd.f32 %v1890, %v1958
    %v1960 = vpop.f32.mrf.mxu0
    %1961 = vdwg.mxu0
    %v1962 = vxor.u32 %v1959, 2147483648
    %v1963 = vmul.f32 %v1962, 1.442695
    %v1964 = vpow.pop %v1963
    %v1965 = vadd.f32 %v1964, 1.0
    %v1966 = vrcp.pop %v1965
    %v1967 = vmul.f32 1.0, %v1966
    %vm1968 = vcmask 1024
    %1969 = vst.msk [vmem:[%s20] sm:$0x3] %vm1968, %v1967
    // Predicated region
    $region98: #{forward.1} parent=1 // pred_check
      _
    $region99: #{forward.1} parent=1 // pred_check_branch
      %1971 = sbr.rel (0) target = $region101
    $region100: #{forward.1} parent=1 // pred_region
      _
    $region101: #{forward.1} parent=1 // pred_fallthru
      _
    // Predicated region
    $region102: #{forward.1} parent=1 // pred_check
      _
    $region103: #{forward.1} parent=1 // pred_check_branch
      %1973 = sbr.rel (0) target = $region105
    $region104: #{forward.1} parent=1 // pred_region
      _
    $region105: #{forward.1} parent=1 // pred_fallthru
      _
    %1974 = vsyncpa [#allocation4], 1
    %1975 = vsyncpa [#allocation6], 1
    %1976 = vsyncpa [#allocation9], 1

</llo_original>
